<compile_context>
chip_gen: v5e
topology: v5e:2x2
jax: 0.10.0
libtpu: 0.0.40
codegen_flags: <defaults>
</compile_context>

<pallas_src>
import functools
import math

import jax
import jax.numpy as jnp
from jax import lax
from jax.experimental import pallas as pl
from jax.experimental.pallas import tpu as pltpu

_SQRT2_INV = 0.7071067811865476
_LANE = 128        # lane-dense last-dim granularity
_MASK = -1e30      # finite "minus infinity" for masked kv positions


def _round_up(n, m):
    return (n + m - 1) // m * m


def _pad2d(a, rows, cols):
    r, c = a.shape
    if r == rows and c == cols:
        return a
    return jnp.pad(a, ((0, rows - r), (0, cols - c)))


def _pick_tile(n, candidates):
    for c in candidates:
        if c <= n and n % c == 0:
            return c
    return n


@functools.lru_cache(maxsize=1)
def _hw_config():
    """Per-generation tiling/VMEM budget; conservative (v7x-safe) fallback."""
    vmem = None
    try:
        info = pltpu.get_tpu_info()
        vmem = getattr(info, "vmem_capacity_bytes", None) or getattr(info, "vmem_bytes", None)
    except Exception:
        vmem = None
    if vmem is not None and vmem >= 96 * 1024 * 1024:
        # v5e / v6e: 128 MiB VMEM per TensorCore -> big tiles toward HBM roofline
        return dict(vmem_limit=100 * 1024 * 1024, tile_max=512, tf_max=512,
                    prefer_two=False)
    # v7x (64 MiB/TC) or unknown: smaller tiles, headroom, keep both TCs busy
    return dict(vmem_limit=40 * 1024 * 1024, tile_max=256, tf_max=256,
                prefer_two=True)


def _pick_row_tile(M, cfg):
    Mp8 = _round_up(M, 8)
    if Mp8 <= 128:
        return Mp8
    cands = [c for c in (512, 256, 128) if c <= cfg["tile_max"]]
    if cfg["prefer_two"]:
        # ensure >= 2 row tiles so the second v7x TensorCore gets work
        for c in cands:
            if _round_up(M, c) // c >= 2:
                return c
        return cands[-1]
    for c in cands:
        if Mp8 >= c:
            return c
    return cands[-1]


def _pick_k_tile(Kp, tm, tn, x_bytes, cfg):
    """Use the full K block when it comfortably fits VMEM, else K-tile."""
    budget = int(cfg["vmem_limit"] * 0.6)
    if 2 * (tm * Kp * x_bytes + Kp * tn * 2) + tm * tn * 4 <= budget:
        return Kp
    return _pick_tile(Kp, (512, 256, 128))


# ----------------------------- parameter prep (once, at load time) -----------

def prepare_params(params, num_heads):
    """Pad to lane multiples, cast weights to bf16 once, and fold the
    1/sqrt(head_dim) attention scale into the Q projection columns."""
    D = params["w_qkv"].shape[0]
    F = params["w1"].shape[1]
    hd = D // num_heads
    scale = 1.0 / math.sqrt(hd)

    qkv_scale = jnp.concatenate([jnp.full((D,), scale, jnp.float32),
                                 jnp.ones((2 * D,), jnp.float32)])
    w_qkv = params["w_qkv"] * qkv_scale[None, :]
    b_qkv = params["b_qkv"] * qkv_scale

    Dp = _round_up(D, _LANE)
    Qp = _round_up(3 * D, _LANE)
    Fp = _round_up(F, _LANE)
    f32 = jnp.float32
    return {
        "w_qkv": _pad2d(w_qkv, Dp, Qp).astype(jnp.bfloat16),
        "b_qkv": _pad2d(b_qkv.reshape(1, -1).astype(f32), 1, Qp),
        "w_out": _pad2d(params["w_out"], Dp, Dp).astype(jnp.bfloat16),
        "b_out": _pad2d(params["b_out"].reshape(1, -1).astype(f32), 1, Dp),
        "w1": _pad2d(params["w1"], Dp, Fp).astype(jnp.bfloat16),
        "b1": _pad2d(params["b1"].reshape(1, -1).astype(f32), 1, Fp),
        "w2": _pad2d(params["w2"], Fp, Dp).astype(jnp.bfloat16),
        "b2": _pad2d(params["b2"].reshape(1, -1).astype(f32), 1, Dp),
    }


# ----------------------------- Linear (x @ W + b [+ residual]) ---------------

def _linear_kernel(x_ref, w_ref, b_ref, o_ref, acc_ref):
    k = pl.program_id(2)

    @pl.when(k == 0)
    def _():
        acc_ref[...] = jnp.zeros_like(acc_ref)

    acc_ref[...] += jnp.dot(x_ref[...].astype(jnp.bfloat16), w_ref[...],
                            preferred_element_type=jnp.float32)

    @pl.when(k == pl.num_programs(2) - 1)
    def _():
        o_ref[...] = (acc_ref[...] + b_ref[...]).astype(o_ref.dtype)


def _linear_residual_kernel(x_ref, w_ref, b_ref, r_ref, o_ref, acc_ref):
    k = pl.program_id(2)

    @pl.when(k == 0)
    def _():
        acc_ref[...] = jnp.zeros_like(acc_ref)

    acc_ref[...] += jnp.dot(x_ref[...].astype(jnp.bfloat16), w_ref[...],
                            preferred_element_type=jnp.float32)

    @pl.when(k == pl.num_programs(2) - 1)
    def _():
        o_ref[...] = (acc_ref[...] + b_ref[...]
                      + r_ref[...].astype(jnp.float32)).astype(o_ref.dtype)


def linear_pallas(x2d, w_p, b_p, *, n_out, residual=None, out_dtype=None):
    """x2d: [M, K]; w_p: [Kp, Np] bf16 pre-padded; b_p: [1, Np] f32 -> [M, n_out]."""
    M, K = x2d.shape
    Kp, Np = w_p.shape
    cfg = _hw_config()
    out_dtype = out_dtype or x2d.dtype

    tm = _pick_row_tile(M, cfg)
    Mp = _round_up(M, tm)
    tn = _pick_tile(Np, (cfg["tile_max"], 256, 128))
    tk = _pick_k_tile(Kp, tm, tn, x2d.dtype.itemsize, cfg)

    x_p = _pad2d(x2d, Mp, Kp)

    in_specs = [
        pl.BlockSpec((tm, tk), lambda i, j, k: (i, k)),   # x row/K block
        pl.BlockSpec((tk, tn), lambda i, j, k: (k, j)),   # weight block (bf16)
        pl.BlockSpec((1, tn), lambda i, j, k: (0, j)),    # bias block
    ]
    args = [x_p, w_p, b_p]
    kernel = _linear_kernel
    if residual is not None:
        in_specs.append(pl.BlockSpec((tm, tn), lambda i, j, k: (i, j)))
        args.append(_pad2d(residual, Mp, Np))
        kernel = _linear_residual_kernel

    cost = pl.CostEstimate(
        flops=2 * Mp * Kp * Np,
        transcendentals=0,
        bytes_accessed=int(x_p.size * x_p.dtype.itemsize + w_p.size * 2 + b_p.size * 4
                           + Mp * Np * jnp.dtype(out_dtype).itemsize
                           + (Mp * Np * 4 if residual is not None else 0)),
    )

    out = pl.pallas_call(
        kernel,
        out_shape=jax.ShapeDtypeStruct((Mp, Np), out_dtype),
        grid_spec=pltpu.PrefetchScalarGridSpec(
            num_scalar_prefetch=0,
            grid=(Mp // tm, Np // tn, Kp // tk),           # K (reduction) axis last
            in_specs=in_specs,
            out_specs=pl.BlockSpec((tm, tn), lambda i, j, k: (i, j)),
            scratch_shapes=[pltpu.VMEM((tm, tn), jnp.float32)],
        ),
        compiler_params=pltpu.CompilerParams(
            dimension_semantics=("parallel", "parallel", "arbitrary"),
            vmem_limit_bytes=cfg["vmem_limit"],
        ),
        cost_estimate=cost,
    )(*args)
    return out[:M, :n_out]


# ----------------------------- Attention (flash, G heads per step) -----------

def _attention_kernel(q_ref, k_ref, v_ref, o_ref, m_sc, l_sc, acc_sc,
                      *, kv_tile, kv_valid, mask_kv):
    ki = pl.program_id(2)

    @pl.when(ki == 0)
    def _():
        m_sc[...] = jnp.full(m_sc.shape, _MASK, dtype=m_sc.dtype)
        l_sc[...] = jnp.zeros_like(l_sc)
        acc_sc[...] = jnp.zeros_like(acc_sc)

    # [G, tq, hd] x [G, tk, hd] -> [G, tq, tk] on the MXU (f32 accumulation).
    # NOTE: the 1/sqrt(head_dim) scale was folded into the Q weights at prep time.
    s = jnp.einsum("gqd,gkd->gqk", q_ref[...], k_ref[...],
                   preferred_element_type=jnp.float32)
    if mask_kv:  # static: only emitted when the kv axis was zero-padded
        j = ki * kv_tile + lax.broadcasted_iota(jnp.int32, s.shape, 2)
        s = jnp.where(j < kv_valid, s, _MASK)

    m_new = jnp.maximum(m_sc[...], jnp.max(s, axis=-1, keepdims=True))
    alpha = jnp.exp(m_sc[...] - m_new)
    p = jnp.exp(s - m_new)
    l_sc[...] = alpha * l_sc[...] + jnp.sum(p, axis=-1, keepdims=True)
    acc_sc[...] = alpha * acc_sc[...] + jnp.einsum(
        "gqk,gkd->gqd", p.astype(v_ref.dtype), v_ref[...],
        preferred_element_type=jnp.float32)
    m_sc[...] = m_new

    @pl.when(ki == pl.num_programs(2) - 1)
    def _():
        o_ref[...] = (acc_sc[...]
                      * pl.reciprocal(l_sc[...], approx=True)).astype(o_ref.dtype)


def _seq_tiles(S):
    if S <= 512:
        Sp = _round_up(S, 8)
        return Sp, Sp, Sp
    Sp = _round_up(S, 128)
    return Sp, _pick_tile(Sp, (256, 128)), _pick_tile(Sp, (512, 256, 128))


def _pick_head_group(BH, tq, tk):
    for cand in (16, 8, 4, 2, 1):
        if BH % cand == 0 and cand * tq * tk * 4 <= 4 * 1024 * 1024:
            return cand
    return 1


def attention_pallas(q, k, v):
    """q/k/v: [B*H, S, hd] bf16 -> context [B*H, S, hd] bf16 (unmasked softmax)."""
    BH, S, hd = q.shape
    cfg = _hw_config()
    Sp, tq, tk = _seq_tiles(S)
    if Sp != S:
        pad = ((0, 0), (0, Sp - S), (0, 0))
        q, k, v = jnp.pad(q, pad), jnp.pad(k, pad), jnp.pad(v, pad)
    G = _pick_head_group(BH, tq, tk)

    kernel = functools.partial(_attention_kernel, kv_tile=tk, kv_valid=S,
                               mask_kv=(Sp != S))
    cost = pl.CostEstimate(
        flops=4 * BH * Sp * Sp * hd,
        transcendentals=BH * Sp * Sp,
        bytes_accessed=int(4 * BH * Sp * hd * q.dtype.itemsize),
    )
    out = pl.pallas_call(
        kernel,
        out_shape=jax.ShapeDtypeStruct((BH, Sp, hd), jnp.bfloat16),
        grid_spec=pltpu.PrefetchScalarGridSpec(
            num_scalar_prefetch=0,
            grid=(BH // G, Sp // tq, Sp // tk),            # kv (reduction) axis last
            in_specs=[
                pl.BlockSpec((G, tq, hd), lambda g, qi, ki: (g, qi, 0)),
                pl.BlockSpec((G, tk, hd), lambda g, qi, ki: (g, ki, 0)),
                pl.BlockSpec((G, tk, hd), lambda g, qi, ki: (g, ki, 0)),
            ],
            out_specs=pl.BlockSpec((G, tq, hd), lambda g, qi, ki: (g, qi, 0)),
            scratch_shapes=[pltpu.VMEM((G, tq, 1), jnp.float32),   # running max
                            pltpu.VMEM((G, tq, 1), jnp.float32),   # running denom
                            pltpu.VMEM((G, tq, hd), jnp.float32)], # output acc
        ),
        compiler_params=pltpu.CompilerParams(
            dimension_semantics=("parallel", "parallel", "arbitrary"),
            vmem_limit_bytes=cfg["vmem_limit"],
        ),
        cost_estimate=cost,
    )(q, k, v)
    return out[:, :S, :]


# ----------------------------- MLP (fc1 -> GELU -> fc2) + residual -----------

def _mlp_kernel(x_ref, w1_ref, b1_ref, w2_ref, b2_ref, o_ref, acc_ref):
    f = pl.program_id(1)

    @pl.when(f == 0)
    def _():
        acc_ref[...] = jnp.zeros_like(acc_ref)

    xb = x_ref[...].astype(jnp.bfloat16)
    h = jnp.dot(xb, w1_ref[...], preferred_element_type=jnp.float32) + b1_ref[...]
    h = 0.5 * h * (1.0 + lax.erf(h * _SQRT2_INV))          # exact erf GELU (torch default)
    acc_ref[...] += jnp.dot(h.astype(jnp.bfloat16), w2_ref[...],
                            preferred_element_type=jnp.float32)

    @pl.when(f == pl.num_programs(1) - 1)
    def _():
        # residual fused: the MLP residual is its own input tile (f32), no extra DMA
        o_ref[...] = (acc_ref[...] + b2_ref[...]
                      + x_ref[...].astype(jnp.float32)).astype(o_ref.dtype)


def mlp_pallas(x2d, w1_p, b1_p, w2_p, b2_p, *, n_out):
    """x2d: [M, D] f32; w1_p: [Dp, Fp] bf16; w2_p: [Fp, Dp] bf16 -> x + MLP(x)."""
    M, D = x2d.shape
    Dp, Fp = w1_p.shape
    cfg = _hw_config()
    tm = _pick_row_tile(M, cfg)
    Mp = _round_up(M, tm)
    tf = _pick_tile(Fp, (cfg["tf_max"], 256, 128))

    x_p = _pad2d(x2d, Mp, Dp)
    cost = pl.CostEstimate(
        flops=4 * Mp * Dp * Fp,
        transcendentals=Mp * Fp,
        bytes_accessed=int(x_p.size * 4 + w1_p.size * 2 + w2_p.size * 2
                           + b1_p.size * 4 + b2_p.size * 4 + Mp * Dp * 4),
    )

    out = pl.pallas_call(
        _mlp_kernel,
        out_shape=jax.ShapeDtypeStruct((Mp, Dp), jnp.float32),
        grid_spec=pltpu.PrefetchScalarGridSpec(
            num_scalar_prefetch=0,
            grid=(Mp // tm, Fp // tf),                     # ff (reduction) axis last
            in_specs=[
                pl.BlockSpec((tm, Dp), lambda i, f: (i, 0)),   # x row tile (also residual)
                pl.BlockSpec((Dp, tf), lambda i, f: (0, f)),   # W1 column block
                pl.BlockSpec((1, tf), lambda i, f: (0, f)),    # b1 block
                pl.BlockSpec((tf, Dp), lambda i, f: (f, 0)),   # W2 row block
                pl.BlockSpec((1, Dp), lambda i, f: (0, 0)),    # b2
            ],
            out_specs=pl.BlockSpec((tm, Dp), lambda i, f: (i, 0)),
            scratch_shapes=[pltpu.VMEM((tm, Dp), jnp.float32)],
        ),
        compiler_params=pltpu.CompilerParams(
            dimension_semantics=("parallel", "arbitrary"),
            vmem_limit_bytes=cfg["vmem_limit"],
        ),
        cost_estimate=cost,
    )(x_p, w1_p, b1_p, w2_p, b2_p)
    return out[:M, :n_out]


# ----------------------------- Full TransformerLayer forward -----------------

def transformer_layer_forward(x, pp, *, num_heads):
    """x: [B, S, D] f32; pp = prepare_params(...).  x += Attn(x); x += MLP(x)."""
    B, S, D = x.shape
    hd = D // num_heads
    M = B * S
    x2d = x.reshape(M, D)                                   # f32 residual

    # QKV projection -> bf16 intermediate (only ever an MXU operand downstream)
    qkv = linear_pallas(x2d, pp["w_qkv"], pp["b_qkv"], n_out=3 * D,
                        out_dtype=jnp.bfloat16)             # [M, 3D] bf16
    q, k, v = jnp.split(qkv, 3, axis=-1)

    def to_heads(t):                                        # [M, D] -> [B*H, S, hd]
        return (t.reshape(B, S, num_heads, hd)
                 .transpose(0, 2, 1, 3)
                 .reshape(B * num_heads, S, hd))

    ctx = attention_pallas(to_heads(q), to_heads(k), to_heads(v))   # bf16
    ctx = (ctx.reshape(B, num_heads, S, hd)
              .transpose(0, 2, 1, 3)
              .reshape(M, D))
    # TODO(synk): attention dropout (p=0.1) only applies in training mode; this
    # implements the inference path (dropout_p = 0), so it is omitted.

    # out_proj with fused residual:  x1 = x + out_proj(ctx)   (f32)
    x1 = linear_pallas(ctx, pp["w_out"], pp["b_out"], n_out=D,
                       residual=x2d, out_dtype=jnp.float32)

    # MLP with fused residual:  x2 = x1 + fc2(gelu(fc1(x1)))  (f32)
    x2 = mlp_pallas(x1, pp["w1"], pp["b1"], pp["w2"], pp["b2"], n_out=D)
    return x2.reshape(B, S, D)


# ----------------------------- Pure-JAX f32 reference ------------------------

def transformer_layer_reference(x, params, *, num_heads):
    B, S, D = x.shape
    hd = D // num_heads
    qkv = x @ params["w_qkv"] + params["b_qkv"]
    q, k, v = jnp.split(qkv, 3, axis=-1)

    def to_heads(t):
        return t.reshape(B, S, num_heads, hd).transpose(0, 2, 1, 3)

    q, k, v = to_heads(q), to_heads(k), to_heads(v)
    s = jnp.einsum("bhqd,bhkd->bhqk", q, k) * (1.0 / math.sqrt(hd))
    p = jax.nn.softmax(s, axis=-1)
    ctx = jnp.einsum("bhqk,bhkd->bhqd", p, v)
    ctx = ctx.transpose(0, 2, 1, 3).reshape(B, S, D)
    x = x + (ctx @ params["w_out"] + params["b_out"])
    h = x @ params["w1"] + params["b1"]
    h = 0.5 * h * (1.0 + lax.erf(h * _SQRT2_INV))
    x = x + (h @ params["w2"] + params["b2"])
    return x


if __name__ == "__main__":
    batch, seq, dim, num_heads, ff_dim = 2, 8, 32, 4, 64

    key = jax.random.PRNGKey(0)
    keys = jax.random.split(key, 9)
    x = jax.random.normal(keys[0], (batch, seq, dim), dtype=jnp.float32)
    # weights stored input-major ([in, out]) == transpose of nn.Linear [out, in]
    params = {
        "w_qkv": jax.random.normal(keys[1], (dim, 3 * dim), jnp.float32) * 0.05,
        "b_qkv": jax.random.normal(keys[2], (3 * dim,), jnp.float32) * 0.05,
        "w_out": jax.random.normal(keys[3], (dim, dim), jnp.float32) * 0.05,
        "b_out": jax.random.normal(keys[4], (dim,), jnp.float32) * 0.05,
        "w1": jax.random.normal(keys[5], (dim, ff_dim), jnp.float32) * 0.05,
        "b1": jax.random.normal(keys[6], (ff_dim,), jnp.float32) * 0.05,
        "w2": jax.random.normal(keys[7], (ff_dim, dim), jnp.float32) * 0.05,
        "b2": jax.random.normal(keys[8], (dim,), jnp.float32) * 0.05,
    }

    prepped = jax.tree_util.tree_map(jax.block_until_ready,
                                     prepare_params(params, num_heads))
    fwd = jax.jit(functools.partial(transformer_layer_forward, num_heads=num_heads))
    out = jax.block_until_ready(fwd(x, prepped))

    ref = transformer_layer_reference(x, params, num_heads=num_heads)
    assert out.shape == (batch, seq, dim)
    # bf16 MXU operands / bf16 intermediates (f32 accumulation) => loosened tolerance
    err = float(jnp.max(jnp.abs(out - ref)))
    assert jnp.allclose(out, ref, atol=2e-2, rtol=2e-2), f"mismatch, max err {err}"

    print("KERNEL_OK")
</pallas_src>

<mosaic_0001>
module attributes {stable_mosaic.version = 11 : i64} {
  func.func @_linear_kernel(%arg0: i32, %arg1: i32, %arg2: i32, %arg3: memref<16x128xf32, #tpu.memory_space<vmem>>, %arg4: memref<128x128xbf16, #tpu.memory_space<vmem>>, %arg5: memref<1x128xf32, #tpu.memory_space<vmem>>, %arg6: memref<16x128xbf16, #tpu.memory_space<vmem>>, %arg7: memref<16x128xf32, #tpu.memory_space<vmem>>) attributes {dimension_semantics = [#tpu.dimension_semantics<parallel>, #tpu.dimension_semantics<parallel>, #tpu.dimension_semantics<arbitrary>], iteration_bounds = array<i64: 1, 1, 1>, scalar_prefetch = 0 : i64, scratch_operands = 1 : i64, tpu.core_type = #tpu.core_type<tc>, window_params = [{transform_indices = @transform_0, window_bounds = array<i64: 16, 128>}, {transform_indices = @transform_1, window_bounds = array<i64: 128, 128>}, {transform_indices = @transform_2, window_bounds = array<i64: 1, 128>}, {transform_indices = @transform_3, window_bounds = array<i64: 16, 128>}]} {
    %c0_i32 = arith.constant 0 : i32
    %0 = arith.cmpi eq, %arg2, %c0_i32 : i32
    %1 = arith.extui %0 : i1 to i32
    %c0_i32_0 = arith.constant 0 : i32
    %2 = arith.cmpi ne, %1, %c0_i32_0 : i32
    scf.if %2 {
      %cst_10 = arith.constant 0.000000e+00 : f32
      %13 = vector.broadcast %cst_10 : f32 to vector<16x128xf32>
      %c0_11 = arith.constant 0 : index
      %c0_12 = arith.constant 0 : index
      %14 = vector.load %arg7[%c0_11, %c0_12] : memref<16x128xf32, #tpu.memory_space<vmem>>, vector<16x128xf32>
      tpu.vector_store %arg7[%c0_11, %c0_12], %13 {strides = array<i32>} : memref<16x128xf32, #tpu.memory_space<vmem>>, vector<16x128xf32>,
    } else {
    }
    %c0 = arith.constant 0 : index
    %c0_1 = arith.constant 0 : index
    %3 = vector.load %arg7[%c0, %c0_1] : memref<16x128xf32, #tpu.memory_space<vmem>>, vector<16x128xf32>
    %c0_2 = arith.constant 0 : index
    %c0_3 = arith.constant 0 : index
    %4 = vector.load %arg3[%c0_2, %c0_3] : memref<16x128xf32, #tpu.memory_space<vmem>>, vector<16x128xf32>
    %5 = arith.truncf %4 : vector<16x128xf32> to vector<16x128xbf16>
    %c0_4 = arith.constant 0 : index
    %c0_5 = arith.constant 0 : index
    %6 = vector.load %arg4[%c0_4, %c0_5] : memref<128x128xbf16, #tpu.memory_space<vmem>>, vector<128x128xbf16>
    %cst = arith.constant dense<0.000000e+00> : vector<16x128xf32>
    %7 = tpu.matmul %5, %6, %cst {dimension_numbers = #tpu.dot_dimension_numbers<[1], [0], [0], [1], [0, 0, 1, 1], [], []>} : vector<16x128xbf16>, vector<128x128xbf16>, vector<16x128xf32> -> vector<16x128xf32>
    %8 = arith.addf %3, %7 : vector<16x128xf32>
    %c0_6 = arith.constant 0 : index
    %c0_7 = arith.constant 0 : index
    %9 = vector.load %arg7[%c0_6, %c0_7] : memref<16x128xf32, #tpu.memory_space<vmem>>, vector<16x128xf32>
    tpu.vector_store %arg7[%c0_6, %c0_7], %8 {strides = array<i32>} : memref<16x128xf32, #tpu.memory_space<vmem>>, vector<16x128xf32>,
    %c0_i32_8 = arith.constant 0 : i32
    %10 = arith.cmpi eq, %arg2, %c0_i32_8 : i32
    %11 = arith.extui %10 : i1 to i32
    %c0_i32_9 = arith.constant 0 : i32
    %12 = arith.cmpi ne, %11, %c0_i32_9 : i32
    scf.if %12 {
      %c0_10 = arith.constant 0 : index
      %c0_11 = arith.constant 0 : index
      %13 = vector.load %arg7[%c0_10, %c0_11] : memref<16x128xf32, #tpu.memory_space<vmem>>, vector<16x128xf32>
      %c0_12 = arith.constant 0 : index
      %c0_13 = arith.constant 0 : index
      %14 = vector.load %arg5[%c0_12, %c0_13] : memref<1x128xf32, #tpu.memory_space<vmem>>, vector<1x128xf32>
      %15 = vector.broadcast %14 : vector<1x128xf32> to vector<16x128xf32>
      %16 = arith.addf %13, %15 : vector<16x128xf32>
      %17 = arith.truncf %16 : vector<16x128xf32> to vector<16x128xbf16>
      %c0_14 = arith.constant 0 : index
      %c0_15 = arith.constant 0 : index
      %18 = vector.load %arg6[%c0_14, %c0_15] : memref<16x128xbf16, #tpu.memory_space<vmem>>, vector<16x128xbf16>
      tpu.vector_store %arg6[%c0_14, %c0_15], %17 {strides = array<i32>} : memref<16x128xbf16, #tpu.memory_space<vmem>>, vector<16x128xbf16>,
    } else {
    }
    return
  }
  func.func @transform_0(%arg0: i32, %arg1: i32, %arg2: i32) -> (i32, i32) {
    %c0_i32 = arith.constant 0 : i32
    return %arg0, %arg2 : i32, i32
  }
  func.func @transform_1(%arg0: i32, %arg1: i32, %arg2: i32) -> (i32, i32) {
    %c0_i32 = arith.constant 0 : i32
    return %arg2, %arg1 : i32, i32
  }
  func.func @transform_2(%arg0: i32, %arg1: i32, %arg2: i32) -> (i32, i32) {
    %c0_i32 = arith.constant 0 : i32
    %c0_i32_0 = arith.constant 0 : i32
    return %c0_i32, %arg1 : i32, i32
  }
  func.func @transform_3(%arg0: i32, %arg1: i32, %arg2: i32) -> (i32, i32) {
    %c0_i32 = arith.constant 0 : i32
    return %arg0, %arg1 : i32, i32
  }
}

module attributes {stable_mosaic.version = 11 : i64} {
  func.func @_attention_kernel(%arg0: i32, %arg1: i32, %arg2: i32, %arg3: memref<8x8x8xbf16, #tpu.memory_space<vmem>>, %arg4: memref<8x8x8xbf16, #tpu.memory_space<vmem>>, %arg5: memref<8x8x8xbf16, #tpu.memory_space<vmem>>, %arg6: memref<8x8x8xbf16, #tpu.memory_space<vmem>>, %arg7: memref<8x8x1xf32, #tpu.memory_space<vmem>>, %arg8: memref<8x8x1xf32, #tpu.memory_space<vmem>>, %arg9: memref<8x8x8xf32, #tpu.memory_space<vmem>>) attributes {dimension_semantics = [#tpu.dimension_semantics<parallel>, #tpu.dimension_semantics<parallel>, #tpu.dimension_semantics<arbitrary>], iteration_bounds = array<i64: 1, 1, 1>, scalar_prefetch = 0 : i64, scratch_operands = 3 : i64, tpu.core_type = #tpu.core_type<tc>, window_params = [{transform_indices = @transform_0, window_bounds = array<i64: 8, 8, 8>}, {transform_indices = @transform_1, window_bounds = array<i64: 8, 8, 8>}, {transform_indices = @transform_2, window_bounds = array<i64: 8, 8, 8>}, {transform_indices = @transform_3, window_bounds = array<i64: 8, 8, 8>}]} {
    %c0_i32 = arith.constant 0 : i32
    %0 = arith.cmpi eq, %arg2, %c0_i32 : i32
    %1 = arith.extui %0 : i1 to i32
    %c0_i32_0 = arith.constant 0 : i32
    %2 = arith.cmpi ne, %1, %c0_i32_0 : i32
    scf.if %2 {
      %cst_35 = arith.constant -1.000000e+30 : f32
      %34 = vector.broadcast %cst_35 : f32 to vector<8x8x1xf32>
      %c0_36 = arith.constant 0 : index
      %c0_37 = arith.constant 0 : index
      %c0_38 = arith.constant 0 : index
      %35 = vector.load %arg7[%c0_36, %c0_37, %c0_38] : memref<8x8x1xf32, #tpu.memory_space<vmem>>, vector<8x8x1xf32>
      tpu.vector_store %arg7[%c0_36, %c0_37, %c0_38], %34 {strides = array<i32>} : memref<8x8x1xf32, #tpu.memory_space<vmem>>, vector<8x8x1xf32>,
      %cst_39 = arith.constant 0.000000e+00 : f32
      %36 = vector.broadcast %cst_39 : f32 to vector<8x8x1xf32>
      %c0_40 = arith.constant 0 : index
      %c0_41 = arith.constant 0 : index
      %c0_42 = arith.constant 0 : index
      %37 = vector.load %arg8[%c0_40, %c0_41, %c0_42] : memref<8x8x1xf32, #tpu.memory_space<vmem>>, vector<8x8x1xf32>
      tpu.vector_store %arg8[%c0_40, %c0_41, %c0_42], %36 {strides = array<i32>} : memref<8x8x1xf32, #tpu.memory_space<vmem>>, vector<8x8x1xf32>,
      %cst_43 = arith.constant 0.000000e+00 : f32
      %38 = vector.broadcast %cst_43 : f32 to vector<8x8x8xf32>
      %c0_44 = arith.constant 0 : index
      %c0_45 = arith.constant 0 : index
      %c0_46 = arith.constant 0 : index
      %39 = vector.load %arg9[%c0_44, %c0_45, %c0_46] : memref<8x8x8xf32, #tpu.memory_space<vmem>>, vector<8x8x8xf32>
      tpu.vector_store %arg9[%c0_44, %c0_45, %c0_46], %38 {strides = array<i32>} : memref<8x8x8xf32, #tpu.memory_space<vmem>>, vector<8x8x8xf32>,
    } else {
    }
    %c0 = arith.constant 0 : index
    %c0_1 = arith.constant 0 : index
    %c0_2 = arith.constant 0 : index
    %3 = vector.load %arg3[%c0, %c0_1, %c0_2] : memref<8x8x8xbf16, #tpu.memory_space<vmem>>, vector<8x8x8xbf16>
    %c0_3 = arith.constant 0 : index
    %c0_4 = arith.constant 0 : index
    %c0_5 = arith.constant 0 : index
    %4 = vector.load %arg4[%c0_3, %c0_4, %c0_5] : memref<8x8x8xbf16, #tpu.memory_space<vmem>>, vector<8x8x8xbf16>
    "tpu.trace_start"() <{level = 10 : i32, message = "gqd,gkd->gqk"}> : () -> ()
    %cst = arith.constant dense<0.000000e+00> : vector<8x8x8xf32>
    %5 = tpu.matmul %3, %4, %cst {dimension_numbers = #tpu.dot_dimension_numbers<[2], [2], [1], [1], [0, 0, 0, 1, 1, 1], [0], [0]>} : vector<8x8x8xbf16>, vector<8x8x8xbf16>, vector<8x8x8xf32> -> vector<8x8x8xf32>
    "tpu.trace_stop"() : () -> ()
    %c0_6 = arith.constant 0 : index
    %c0_7 = arith.constant 0 : index
    %c0_8 = arith.constant 0 : index
    %6 = vector.load %arg7[%c0_6, %c0_7, %c0_8] : memref<8x8x1xf32, #tpu.memory_space<vmem>>, vector<8x8x1xf32>
    %cst_9 = arith.constant dense<0xFF800000> : vector<8x8xf32>
    %7 = vector.multi_reduction <maximumf>, %5, %cst_9 [2] : vector<8x8x8xf32> to vector<8x8xf32>
    %8 = vector.shape_cast %7 : vector<8x8xf32> to vector<8x8x1xf32>
    %9 = arith.maximumf %6, %8 : vector<8x8x1xf32>
    %c0_10 = arith.constant 0 : index
    %c0_11 = arith.constant 0 : index
    %c0_12 = arith.constant 0 : index
    %10 = vector.load %arg7[%c0_10, %c0_11, %c0_12] : memref<8x8x1xf32, #tpu.memory_space<vmem>>, vector<8x8x1xf32>
    %11 = arith.subf %10, %9 : vector<8x8x1xf32>
    %12 = math.exp %11 : vector<8x8x1xf32>
    %13 = vector.broadcast %9 : vector<8x8x1xf32> to vector<8x8x8xf32>
    %14 = arith.subf %5, %13 : vector<8x8x8xf32>
    %15 = math.exp %14 : vector<8x8x8xf32>
    %c0_13 = arith.constant 0 : index
    %c0_14 = arith.constant 0 : index
    %c0_15 = arith.constant 0 : index
    %16 = vector.load %arg8[%c0_13, %c0_14, %c0_15] : memref<8x8x1xf32, #tpu.memory_space<vmem>>, vector<8x8x1xf32>
    %17 = arith.mulf %12, %16 : vector<8x8x1xf32>
    %cst_16 = arith.constant dense<0.000000e+00> : vector<8x8xf32>
    %18 = vector.multi_reduction <add>, %15, %cst_16 [2] : vector<8x8x8xf32> to vector<8x8xf32>
    %19 = vector.shape_cast %18 : vector<8x8xf32> to vector<8x8x1xf32>
    %20 = arith.addf %17, %19 : vector<8x8x1xf32>
    %c0_17 = arith.constant 0 : index
    %c0_18 = arith.constant 0 : index
    %c0_19 = arith.constant 0 : index
    %21 = vector.load %arg8[%c0_17, %c0_18, %c0_19] : memref<8x8x1xf32, #tpu.memory_space<vmem>>, vector<8x8x1xf32>
    tpu.vector_store %arg8[%c0_17, %c0_18, %c0_19], %20 {strides = array<i32>} : memref<8x8x1xf32, #tpu.memory_space<vmem>>, vector<8x8x1xf32>,
    %c0_20 = arith.constant 0 : index
    %c0_21 = arith.constant 0 : index
    %c0_22 = arith.constant 0 : index
    %22 = vector.load %arg9[%c0_20, %c0_21, %c0_22] : memref<8x8x8xf32, #tpu.memory_space<vmem>>, vector<8x8x8xf32>
    %23 = vector.broadcast %12 : vector<8x8x1xf32> to vector<8x8x8xf32>
    %24 = arith.mulf %23, %22 : vector<8x8x8xf32>
    %25 = arith.truncf %15 : vector<8x8x8xf32> to vector<8x8x8xbf16>
    %c0_23 = arith.constant 0 : index
    %c0_24 = arith.constant 0 : index
    %c0_25 = arith.constant 0 : index
    %26 = vector.load %arg5[%c0_23, %c0_24, %c0_25] : memref<8x8x8xbf16, #tpu.memory_space<vmem>>, vector<8x8x8xbf16>
    "tpu.trace_start"() <{level = 10 : i32, message = "gqk,gkd->gqd"}> : () -> ()
    %cst_26 = arith.constant dense<0.000000e+00> : vector<8x8x8xf32>
    %27 = tpu.matmul %25, %26, %cst_26 {dimension_numbers = #tpu.dot_dimension_numbers<[2], [1], [1], [2], [0, 0, 0, 1, 1, 2], [0], [0]>} : vector<8x8x8xbf16>, vector<8x8x8xbf16>, vector<8x8x8xf32> -> vector<8x8x8xf32>
    "tpu.trace_stop"() : () -> ()
    %28 = arith.addf %24, %27 : vector<8x8x8xf32>
    %c0_27 = arith.constant 0 : index
    %c0_28 = arith.constant 0 : index
    %c0_29 = arith.constant 0 : index
    %29 = vector.load %arg9[%c0_27, %c0_28, %c0_29] : memref<8x8x8xf32, #tpu.memory_space<vmem>>, vector<8x8x8xf32>
    tpu.vector_store %arg9[%c0_27, %c0_28, %c0_29], %28 {strides = array<i32>} : memref<8x8x8xf32, #tpu.memory_space<vmem>>, vector<8x8x8xf32>,
    %c0_30 = arith.constant 0 : index
    %c0_31 = arith.constant 0 : index
    %c0_32 = arith.constant 0 : index
    %30 = vector.load %arg7[%c0_30, %c0_31, %c0_32] : memref<8x8x1xf32, #tpu.memory_space<vmem>>, vector<8x8x1xf32>
    tpu.vector_store %arg7[%c0_30, %c0_31, %c0_32], %9 {strides = array<i32>} : memref<8x8x1xf32, #tpu.memory_space<vmem>>, vector<8x8x1xf32>,
    %c0_i32_33 = arith.constant 0 : i32
    %31 = arith.cmpi eq, %arg2, %c0_i32_33 : i32
    %32 = arith.extui %31 : i1 to i32
    %c0_i32_34 = arith.constant 0 : i32
    %33 = arith.cmpi ne, %32, %c0_i32_34 : i32
    scf.if %33 {
      %c0_35 = arith.constant 0 : index
      %c0_36 = arith.constant 0 : index
      %c0_37 = arith.constant 0 : index
      %34 = vector.load %arg9[%c0_35, %c0_36, %c0_37] : memref<8x8x8xf32, #tpu.memory_space<vmem>>, vector<8x8x8xf32>
      %c0_38 = arith.constant 0 : index
      %c0_39 = arith.constant 0 : index
      %c0_40 = arith.constant 0 : index
      %35 = vector.load %arg8[%c0_38, %c0_39, %c0_40] : memref<8x8x1xf32, #tpu.memory_space<vmem>>, vector<8x8x1xf32>
      %36 = tpu.reciprocal %35 {approx = true} : vector<8x8x1xf32> -> vector<8x8x1xf32>
      %37 = vector.broadcast %36 : vector<8x8x1xf32> to vector<8x8x8xf32>
      %38 = arith.mulf %34, %37 : vector<8x8x8xf32>
      %39 = arith.truncf %38 : vector<8x8x8xf32> to vector<8x8x8xbf16>
      %c0_41 = arith.constant 0 : index
      %c0_42 = arith.constant 0 : index
      %c0_43 = arith.constant 0 : index
      %40 = vector.load %arg6[%c0_41, %c0_42, %c0_43] : memref<8x8x8xbf16, #tpu.memory_space<vmem>>, vector<8x8x8xbf16>
      tpu.vector_store %arg6[%c0_41, %c0_42, %c0_43], %39 {strides = array<i32>} : memref<8x8x8xbf16, #tpu.memory_space<vmem>>, vector<8x8x8xbf16>,
    } else {
    }
    return
  }
  func.func @transform_0(%arg0: i32, %arg1: i32, %arg2: i32) -> (i32, i32, i32) {
    %c0_i32 = arith.constant 0 : i32
    %c0_i32_0 = arith.constant 0 : i32
    return %arg0, %arg1, %c0_i32 : i32, i32, i32
  }
  func.func @transform_1(%arg0: i32, %arg1: i32, %arg2: i32) -> (i32, i32, i32) {
    %c0_i32 = arith.constant 0 : i32
    %c0_i32_0 = arith.constant 0 : i32
    return %arg0, %arg2, %c0_i32 : i32, i32, i32
  }
  func.func @transform_2(%arg0: i32, %arg1: i32, %arg2: i32) -> (i32, i32, i32) {
    %c0_i32 = arith.constant 0 : i32
    %c0_i32_0 = arith.constant 0 : i32
    return %arg0, %arg2, %c0_i32 : i32, i32, i32
  }
  func.func @transform_3(%arg0: i32, %arg1: i32, %arg2: i32) -> (i32, i32, i32) {
    %c0_i32 = arith.constant 0 : i32
    %c0_i32_0 = arith.constant 0 : i32
    return %arg0, %arg1, %c0_i32 : i32, i32, i32
  }
}

module attributes {stable_mosaic.version = 11 : i64} {
  func.func @_linear_residual_kernel(%arg0: i32, %arg1: i32, %arg2: i32, %arg3: memref<16x128xbf16, #tpu.memory_space<vmem>>, %arg4: memref<128x128xbf16, #tpu.memory_space<vmem>>, %arg5: memref<1x128xf32, #tpu.memory_space<vmem>>, %arg6: memref<16x128xf32, #tpu.memory_space<vmem>>, %arg7: memref<16x128xf32, #tpu.memory_space<vmem>>, %arg8: memref<16x128xf32, #tpu.memory_space<vmem>>) attributes {dimension_semantics = [#tpu.dimension_semantics<parallel>, #tpu.dimension_semantics<parallel>, #tpu.dimension_semantics<arbitrary>], iteration_bounds = array<i64: 1, 1, 1>, scalar_prefetch = 0 : i64, scratch_operands = 1 : i64, tpu.core_type = #tpu.core_type<tc>, window_params = [{transform_indices = @transform_0, window_bounds = array<i64: 16, 128>}, {transform_indices = @transform_1, window_bounds = array<i64: 128, 128>}, {transform_indices = @transform_2, window_bounds = array<i64: 1, 128>}, {transform_indices = @transform_3, window_bounds = array<i64: 16, 128>}, {transform_indices = @transform_4, window_bounds = array<i64: 16, 128>}]} {
    %c0_i32 = arith.constant 0 : i32
    %0 = arith.cmpi eq, %arg2, %c0_i32 : i32
    %1 = arith.extui %0 : i1 to i32
    %c0_i32_0 = arith.constant 0 : i32
    %2 = arith.cmpi ne, %1, %c0_i32_0 : i32
    scf.if %2 {
      %cst_10 = arith.constant 0.000000e+00 : f32
      %12 = vector.broadcast %cst_10 : f32 to vector<16x128xf32>
      %c0_11 = arith.constant 0 : index
      %c0_12 = arith.constant 0 : index
      %13 = vector.load %arg8[%c0_11, %c0_12] : memref<16x128xf32, #tpu.memory_space<vmem>>, vector<16x128xf32>
      tpu.vector_store %arg8[%c0_11, %c0_12], %12 {strides = array<i32>} : memref<16x128xf32, #tpu.memory_space<vmem>>, vector<16x128xf32>,
    } else {
    }
    %c0 = arith.constant 0 : index
    %c0_1 = arith.constant 0 : index
    %3 = vector.load %arg8[%c0, %c0_1] : memref<16x128xf32, #tpu.memory_space<vmem>>, vector<16x128xf32>
    %c0_2 = arith.constant 0 : index
    %c0_3 = arith.constant 0 : index
    %4 = vector.load %arg3[%c0_2, %c0_3] : memref<16x128xbf16, #tpu.memory_space<vmem>>, vector<16x128xbf16>
    %c0_4 = arith.constant 0 : index
    %c0_5 = arith.constant 0 : index
    %5 = vector.load %arg4[%c0_4, %c0_5] : memref<128x128xbf16, #tpu.memory_space<vmem>>, vector<128x128xbf16>
    %cst = arith.constant dense<0.000000e+00> : vector<16x128xf32>
    %6 = tpu.matmul %4, %5, %cst {dimension_numbers = #tpu.dot_dimension_numbers<[1], [0], [0], [1], [0, 0, 1, 1], [], []>} : vector<16x128xbf16>, vector<128x128xbf16>, vector<16x128xf32> -> vector<16x128xf32>
    %7 = arith.addf %3, %6 : vector<16x128xf32>
    %c0_6 = arith.constant 0 : index
    %c0_7 = arith.constant 0 : index
    %8 = vector.load %arg8[%c0_6, %c0_7] : memref<16x128xf32, #tpu.memory_space<vmem>>, vector<16x128xf32>
    tpu.vector_store %arg8[%c0_6, %c0_7], %7 {strides = array<i32>} : memref<16x128xf32, #tpu.memory_space<vmem>>, vector<16x128xf32>,
    %c0_i32_8 = arith.constant 0 : i32
    %9 = arith.cmpi eq, %arg2, %c0_i32_8 : i32
    %10 = arith.extui %9 : i1 to i32
    %c0_i32_9 = arith.constant 0 : i32
    %11 = arith.cmpi ne, %10, %c0_i32_9 : i32
    scf.if %11 {
      %c0_10 = arith.constant 0 : index
      %c0_11 = arith.constant 0 : index
      %12 = vector.load %arg8[%c0_10, %c0_11] : memref<16x128xf32, #tpu.memory_space<vmem>>, vector<16x128xf32>
      %c0_12 = arith.constant 0 : index
      %c0_13 = arith.constant 0 : index
      %13 = vector.load %arg5[%c0_12, %c0_13] : memref<1x128xf32, #tpu.memory_space<vmem>>, vector<1x128xf32>
      %14 = vector.broadcast %13 : vector<1x128xf32> to vector<16x128xf32>
      %15 = arith.addf %12, %14 : vector<16x128xf32>
      %c0_14 = arith.constant 0 : index
      %c0_15 = arith.constant 0 : index
      %16 = vector.load %arg6[%c0_14, %c0_15] : memref<16x128xf32, #tpu.memory_space<vmem>>, vector<16x128xf32>
      %17 = arith.addf %15, %16 : vector<16x128xf32>
      %c0_16 = arith.constant 0 : index
      %c0_17 = arith.constant 0 : index
      %18 = vector.load %arg7[%c0_16, %c0_17] : memref<16x128xf32, #tpu.memory_space<vmem>>, vector<16x128xf32>
      tpu.vector_store %arg7[%c0_16, %c0_17], %17 {strides = array<i32>} : memref<16x128xf32, #tpu.memory_space<vmem>>, vector<16x128xf32>,
    } else {
    }
    return
  }
  func.func @transform_0(%arg0: i32, %arg1: i32, %arg2: i32) -> (i32, i32) {
    %c0_i32 = arith.constant 0 : i32
    return %arg0, %arg2 : i32, i32
  }
  func.func @transform_1(%arg0: i32, %arg1: i32, %arg2: i32) -> (i32, i32) {
    %c0_i32 = arith.constant 0 : i32
    return %arg2, %arg1 : i32, i32
  }
  func.func @transform_2(%arg0: i32, %arg1: i32, %arg2: i32) -> (i32, i32) {
    %c0_i32 = arith.constant 0 : i32
    %c0_i32_0 = arith.constant 0 : i32
    return %c0_i32, %arg1 : i32, i32
  }
  func.func @transform_3(%arg0: i32, %arg1: i32, %arg2: i32) -> (i32, i32) {
    %c0_i32 = arith.constant 0 : i32
    return %arg0, %arg1 : i32, i32
  }
  func.func @transform_4(%arg0: i32, %arg1: i32, %arg2: i32) -> (i32, i32) {
    %c0_i32 = arith.constant 0 : i32
    return %arg0, %arg1 : i32, i32
  }
}

module attributes {stable_mosaic.version = 11 : i64} {
  func.func @_mlp_kernel(%arg0: i32, %arg1: i32, %arg2: memref<16x128xf32, #tpu.memory_space<vmem>>, %arg3: memref<128x128xbf16, #tpu.memory_space<vmem>>, %arg4: memref<1x128xf32, #tpu.memory_space<vmem>>, %arg5: memref<128x128xbf16, #tpu.memory_space<vmem>>, %arg6: memref<1x128xf32, #tpu.memory_space<vmem>>, %arg7: memref<16x128xf32, #tpu.memory_space<vmem>>, %arg8: memref<16x128xf32, #tpu.memory_space<vmem>>) attributes {dimension_semantics = [#tpu.dimension_semantics<parallel>, #tpu.dimension_semantics<arbitrary>], iteration_bounds = array<i64: 1, 1>, scalar_prefetch = 0 : i64, scratch_operands = 1 : i64, tpu.core_type = #tpu.core_type<tc>, window_params = [{transform_indices = @transform_0, window_bounds = array<i64: 16, 128>}, {transform_indices = @transform_1, window_bounds = array<i64: 128, 128>}, {transform_indices = @transform_2, window_bounds = array<i64: 1, 128>}, {transform_indices = @transform_3, window_bounds = array<i64: 128, 128>}, {pipeline_mode = #tpu.pipeline_mode<synchronous>, transform_indices = @transform_4, window_bounds = array<i64: 1, 128>}, {transform_indices = @transform_5, window_bounds = array<i64: 16, 128>}]} {
    %c0_i32 = arith.constant 0 : i32
    %0 = arith.cmpi eq, %arg1, %c0_i32 : i32
    %1 = arith.extui %0 : i1 to i32
    %c0_i32_0 = arith.constant 0 : i32
    %2 = arith.cmpi ne, %1, %c0_i32_0 : i32
    scf.if %2 {
      %cst_18 = arith.constant 0.000000e+00 : f32
      %27 = vector.broadcast %cst_18 : f32 to vector<16x128xf32>
      %c0_19 = arith.constant 0 : index
      %c0_20 = arith.constant 0 : index
      %28 = vector.load %arg8[%c0_19, %c0_20] : memref<16x128xf32, #tpu.memory_space<vmem>>, vector<16x128xf32>
      tpu.vector_store %arg8[%c0_19, %c0_20], %27 {strides = array<i32>} : memref<16x128xf32, #tpu.memory_space<vmem>>, vector<16x128xf32>,
    } else {
    }
    %c0 = arith.constant 0 : index
    %c0_1 = arith.constant 0 : index
    %3 = vector.load %arg2[%c0, %c0_1] : memref<16x128xf32, #tpu.memory_space<vmem>>, vector<16x128xf32>
    %4 = arith.truncf %3 : vector<16x128xf32> to vector<16x128xbf16>
    %c0_2 = arith.constant 0 : index
    %c0_3 = arith.constant 0 : index
    %5 = vector.load %arg3[%c0_2, %c0_3] : memref<128x128xbf16, #tpu.memory_space<vmem>>, vector<128x128xbf16>
    %cst = arith.constant dense<0.000000e+00> : vector<16x128xf32>
    %6 = tpu.matmul %4, %5, %cst {dimension_numbers = #tpu.dot_dimension_numbers<[1], [0], [0], [1], [0, 0, 1, 1], [], []>} : vector<16x128xbf16>, vector<128x128xbf16>, vector<16x128xf32> -> vector<16x128xf32>
    %c0_4 = arith.constant 0 : index
    %c0_5 = arith.constant 0 : index
    %7 = vector.load %arg4[%c0_4, %c0_5] : memref<1x128xf32, #tpu.memory_space<vmem>>, vector<1x128xf32>
    %8 = vector.broadcast %7 : vector<1x128xf32> to vector<16x128xf32>
    %9 = arith.addf %6, %8 : vector<16x128xf32>
    %cst_6 = arith.constant 5.000000e-01 : f32
    %10 = vector.broadcast %cst_6 : f32 to vector<16x128xf32>
    %11 = arith.mulf %10, %9 : vector<16x128xf32>
    %cst_7 = arith.constant 0.707106769 : f32
    %12 = vector.broadcast %cst_7 : f32 to vector<16x128xf32>
    %13 = arith.mulf %9, %12 : vector<16x128xf32>
    %14 = math.erf %13 : vector<16x128xf32>
    %cst_8 = arith.constant 1.000000e+00 : f32
    %15 = vector.broadcast %cst_8 : f32 to vector<16x128xf32>
    %16 = arith.addf %15, %14 : vector<16x128xf32>
    %17 = arith.mulf %11, %16 : vector<16x128xf32>
    %c0_9 = arith.constant 0 : index
    %c0_10 = arith.constant 0 : index
    %18 = vector.load %arg8[%c0_9, %c0_10] : memref<16x128xf32, #tpu.memory_space<vmem>>, vector<16x128xf32>
    %19 = arith.truncf %17 : vector<16x128xf32> to vector<16x128xbf16>
    %c0_11 = arith.constant 0 : index
    %c0_12 = arith.constant 0 : index
    %20 = vector.load %arg5[%c0_11, %c0_12] : memref<128x128xbf16, #tpu.memory_space<vmem>>, vector<128x128xbf16>
    %cst_13 = arith.constant dense<0.000000e+00> : vector<16x128xf32>
    %21 = tpu.matmul %19, %20, %cst_13 {dimension_numbers = #tpu.dot_dimension_numbers<[1], [0], [0], [1], [0, 0, 1, 1], [], []>} : vector<16x128xbf16>, vector<128x128xbf16>, vector<16x128xf32> -> vector<16x128xf32>
    %22 = arith.addf %18, %21 : vector<16x128xf32>
    %c0_14 = arith.constant 0 : index
    %c0_15 = arith.constant 0 : index
    %23 = vector.load %arg8[%c0_14, %c0_15] : memref<16x128xf32, #tpu.memory_space<vmem>>, vector<16x128xf32>
    tpu.vector_store %arg8[%c0_14, %c0_15], %22 {strides = array<i32>} : memref<16x128xf32, #tpu.memory_space<vmem>>, vector<16x128xf32>,
    %c0_i32_16 = arith.constant 0 : i32
    %24 = arith.cmpi eq, %arg1, %c0_i32_16 : i32
    %25 = arith.extui %24 : i1 to i32
    %c0_i32_17 = arith.constant 0 : i32
    %26 = arith.cmpi ne, %25, %c0_i32_17 : i32
    scf.if %26 {
      %c0_18 = arith.constant 0 : index
      %c0_19 = arith.constant 0 : index
      %27 = vector.load %arg8[%c0_18, %c0_19] : memref<16x128xf32, #tpu.memory_space<vmem>>, vector<16x128xf32>
      %c0_20 = arith.constant 0 : index
      %c0_21 = arith.constant 0 : index
      %28 = vector.load %arg6[%c0_20, %c0_21] : memref<1x128xf32, #tpu.memory_space<vmem>>, vector<1x128xf32>
      %29 = vector.broadcast %28 : vector<1x128xf32> to vector<16x128xf32>
      %30 = arith.addf %27, %29 : vector<16x128xf32>
      %c0_22 = arith.constant 0 : index
      %c0_23 = arith.constant 0 : index
      %31 = vector.load %arg2[%c0_22, %c0_23] : memref<16x128xf32, #tpu.memory_space<vmem>>, vector<16x128xf32>
      %32 = arith.addf %30, %31 : vector<16x128xf32>
      %c0_24 = arith.constant 0 : index
      %c0_25 = arith.constant 0 : index
      %33 = vector.load %arg7[%c0_24, %c0_25] : memref<16x128xf32, #tpu.memory_space<vmem>>, vector<16x128xf32>
      tpu.vector_store %arg7[%c0_24, %c0_25], %32 {strides = array<i32>} : memref<16x128xf32, #tpu.memory_space<vmem>>, vector<16x128xf32>,
    } else {
    }
    return
  }
  func.func @transform_0(%arg0: i32, %arg1: i32) -> (i32, i32) {
    %c0_i32 = arith.constant 0 : i32
    %c0_i32_0 = arith.constant 0 : i32
    return %arg0, %c0_i32 : i32, i32
  }
  func.func @transform_1(%arg0: i32, %arg1: i32) -> (i32, i32) {
    %c0_i32 = arith.constant 0 : i32
    %c0_i32_0 = arith.constant 0 : i32
    return %c0_i32, %arg1 : i32, i32
  }
  func.func @transform_2(%arg0: i32, %arg1: i32) -> (i32, i32) {
    %c0_i32 = arith.constant 0 : i32
    %c0_i32_0 = arith.constant 0 : i32
    return %c0_i32, %arg1 : i32, i32
  }
  func.func @transform_3(%arg0: i32, %arg1: i32) -> (i32, i32) {
    %c0_i32 = arith.constant 0 : i32
    %c0_i32_0 = arith.constant 0 : i32
    return %arg1, %c0_i32 : i32, i32
  }
  func.func @transform_4(%arg0: i32, %arg1: i32) -> (i32, i32) {
    %c0_i32 = arith.constant 0 : i32
    %c0_i32_0 = arith.constant 0 : i32
    %c0_i32_1 = arith.constant 0 : i32
    return %c0_i32, %c0_i32_0 : i32, i32
  }
  func.func @transform_5(%arg0: i32, %arg1: i32) -> (i32, i32) {
    %c0_i32 = arith.constant 0 : i32
    %c0_i32_0 = arith.constant 0 : i32
    return %arg0, %c0_i32 : i32, i32
  }
}

</mosaic_0001>

<llo_original>
// kernel: transformer_layer_forward.4
$region0: #{transformer_layer_forward.4}
  #allocation0 [shape = 'u32[]', space=smem, size = 0x4, offset = 0x4, fixed_abs, tag = 'smem constant byte address 0x4 - core index']
  #allocation1 [shape = 'u32[72,128]{1,0:T(1,128)}', space=vmem, size = 0x9000, scoped, tag = 'internal scratch']
  #allocation2 [shape = 'f32[16,128]{1,0:T(8,128)}', space=vmem, size = 0x2000, scoped, tag = 'scratch operand']
  %s0 = inlined_call_operand.vmem [shape: f32[16,128], index: 0, kind: input, shape index: {}]
  %s1 = inlined_call_operand.hbm [shape: bf16[128,128], index: 1, kind: input, shape index: {}]
  %s2 = inlined_call_operand.vmem [shape: f32[1,128], index: 2, kind: input, shape index: {}]
  %s3 = inlined_call_operand.vmem [shape: bf16[16,128], index: 3, kind: output, shape index: {}]
  %s4 = sld [smem:[#allocation0]]
  $region34: #{transformer_layer_forward.4} parent=0
    _
  %s6 = ssub.s32 1, %s4
  %s7 = scalar_select 0, %s6, %s4
  $region1: #{transformer_layer_forward.4} parent=0
    #allocation3 [shape = 'u8[32768]{0}', space=vmem, size = 0x8000, scoped, tag = 'input window, operand 1, single buffered']
    #allocation4 [shape = 's32[1]{0}', space=sflag, size = 0x4, scoped, tag = 'scoped memory for transformer_layer_forward.4']
    %8 = vsyncpa [#allocation4], 0
    // Predicated region
    $region2: #{transformer_layer_forward.4} parent=1 // pred_check
      _
    $region3: #{transformer_layer_forward.4} parent=1 // pred_check_branch
      %10 = sbr.rel (0) target = $region5
    $region4: #{transformer_layer_forward.4} parent=1 // pred_region
      _
    $region5: #{transformer_layer_forward.4} parent=1 // pred_fallthru
      _
    // Predicated region
    $region6: #{transformer_layer_forward.4} parent=1 // pred_check
      _
    $region7: #{transformer_layer_forward.4} parent=1 // pred_check_branch
      %12 = sbr.rel (0) target = $region9
    $region8: #{transformer_layer_forward.4} parent=1 // pred_region
      %14 = vsyncadd [#allocation4], 0
      %s15 = sshll.u32 %s1, 4
      %s16 = int_to_ptr.hbm [resolvable:$true] %s15
      %s17 = sshll.u32 [#allocation3], 4
      %s18 = int_to_ptr.vmem [resolvable:$true] %s17
      %23 = dma.hbm_to_vmem [thread:$0]  %s16, 1024, %s18, [#allocation4], 64, 64, 4
    $region9: #{transformer_layer_forward.4} parent=1 // pred_fallthru
      _
    // Predicated region
    $region10: #{transformer_layer_forward.4} parent=1 // pred_check
      _
    $region11: #{transformer_layer_forward.4} parent=1 // pred_check_branch
      %25 = sbr.rel (0) target = $region13
    $region12: #{transformer_layer_forward.4} parent=1 // pred_region
      _
    $region13: #{transformer_layer_forward.4} parent=1 // pred_fallthru
      _
    // Predicated region
    $region14: #{transformer_layer_forward.4} parent=1 // pred_check
      _
    $region15: #{transformer_layer_forward.4} parent=1 // pred_check_branch
      %27 = sbr.rel (0) target = $region17
    $region16: #{transformer_layer_forward.4} parent=1 // pred_region
      %29 = dma.done [#allocation4], 1024
    $region17: #{transformer_layer_forward.4} parent=1 // pred_fallthru
      _
    %p30 = scmp.eq.s32.totalorder 0, 0
    // Predicated region
    $region18: #{transformer_layer_forward.4} parent=1 // pred_check
      %p31 = pneg %p30
    $region19: #{transformer_layer_forward.4} parent=1 // pred_check_branch
      %33 = sbr.rel (%p31) target = $region21
    $region20: #{transformer_layer_forward.4} parent=1 // pred_region
      %34 = vst [vmem:[#allocation2] sm:$0xff] 0.0
      %35 = vst [vmem:[#allocation2 + $0x8] sm:$0xff] 0.0
    $region21: #{transformer_layer_forward.4} parent=1 // pred_fallthru
      _
    %v36 = vld [vmem:[#allocation2] sm:$0xff]
    %v37 = vld [vmem:[#allocation2 + $0x8] sm:$0xff]
    %v38 = vld [vmem:[%s0] sm:$0xff]
    %v39 = vld [vmem:[%s0 + $0x8] sm:$0xff]
    %v40 = vpack.c.bf16 %v39, %v38
    %v41 = vld [vmem:[#allocation3] sm:$0xf]
    %v42 = vld [vmem:[#allocation3 + $0x4] sm:$0xf]
    %v43 = vld [vmem:[#allocation3 + $0x8] sm:$0xf]
    %v44 = vld [vmem:[#allocation3 + $0xc] sm:$0xf]
    %v45 = vld [vmem:[#allocation3 + $0x10] sm:$0xf]
    %v46 = vld [vmem:[#allocation3 + $0x14] sm:$0xf]
    %v47 = vld [vmem:[#allocation3 + $0x18] sm:$0xf]
    %v48 = vld [vmem:[#allocation3 + $0x1c] sm:$0xf]
    %v49 = vld [vmem:[#allocation3 + $0x20] sm:$0xf]
    %v50 = vld [vmem:[#allocation3 + $0x24] sm:$0xf]
    %v51 = vld [vmem:[#allocation3 + $0x28] sm:$0xf]
    %v52 = vld [vmem:[#allocation3 + $0x2c] sm:$0xf]
    %v53 = vld [vmem:[#allocation3 + $0x30] sm:$0xf]
    %v54 = vld [vmem:[#allocation3 + $0x34] sm:$0xf]
    %v55 = vld [vmem:[#allocation3 + $0x38] sm:$0xf]
    %v56 = vld [vmem:[#allocation3 + $0x3c] sm:$0xf]
    %v73 = vunpack.c.l.b16 %v41
    %v74 = vunpack.c.l.b16 %v42
    %v75 = vunpack.c.l.b16 %v43
    %v76 = vunpack.c.l.b16 %v44
    %v77 = vunpack.c.l.b16 %v45
    %v78 = vunpack.c.l.b16 %v46
    %v79 = vunpack.c.l.b16 %v47
    %v80 = vunpack.c.l.b16 %v48
    %v81 = vunpack.c.l.b16 %v49
    %v82 = vunpack.c.l.b16 %v50
    %v83 = vunpack.c.l.b16 %v51
    %v84 = vunpack.c.l.b16 %v52
    %v85 = vunpack.c.l.b16 %v53
    %v86 = vunpack.c.l.b16 %v54
    %v87 = vunpack.c.l.b16 %v55
    %v88 = vunpack.c.l.b16 %v56
    %v89 = vpack.c.b16 %v74, %v73
    %v90 = vpack.c.b16 %v76, %v75
    %v91 = vpack.c.b16 %v78, %v77
    %v92 = vpack.c.b16 %v80, %v79
    %v93 = vpack.c.b16 %v82, %v81
    %v94 = vpack.c.b16 %v84, %v83
    %v95 = vpack.c.b16 %v86, %v85
    %v96 = vpack.c.b16 %v88, %v87
    %105 = vmatpush.bf16.msra.mxu0 %v96
    %106 = vmatpush.bf16.msra.mxu0 %v95
    %107 = vmatpush.bf16.msra.mxu0 %v94
    %108 = vmatpush.bf16.msra.mxu0 %v93
    %109 = vmatpush.bf16.msra.mxu0 %v92
    %110 = vmatpush.bf16.msra.mxu0 %v91
    %111 = vmatpush.bf16.msra.mxu0 %v90
    %112 = vmatpush.bf16.msra.mxu0 %v89
    %113 = vmatmul.bf16.gmra.mxu0 %v40
    %v114 = vpop.f32.mrf.mxu0
    %v115 = vadd.f32 0.0, %v114
    %v116 = vpop.f32.mrf.mxu0
    %v117 = vadd.f32 0.0, %v116
    %118 = vdwg.mxu0
    %v119 = vadd.f32 %v36, %v115
    %v120 = vadd.f32 %v37, %v117
    %121 = vst [vmem:[#allocation2] sm:$0xff] %v119
    %122 = vst [vmem:[#allocation2 + $0x8] sm:$0xff] %v120
    // Predicated region
    $region22: #{transformer_layer_forward.4} parent=1 // pred_check
      %p123 = pneg %p30
    $region23: #{transformer_layer_forward.4} parent=1 // pred_check_branch
      %125 = sbr.rel (%p123) target = $region25
    $region24: #{transformer_layer_forward.4} parent=1 // pred_region
      %v126 = vld [vmem:[#allocation2] sm:$0xff]
      %v127 = vld [vmem:[#allocation2 + $0x8] sm:$0xff]
      %v128 = vld [vmem:[%s2] sm:$0x1]
      %v130 = vperm.slane %v128, 0
      %v132 = vadd.f32 %v126, %v130
      %v133 = vadd.f32 %v127, %v130
      %v134 = vpack.c.bf16 %v132, %v132
      %v135 = vpack.c.bf16 %v133, %v133
      %136 = vst [vmem:[%s3] sm:$0xf] %v134
      %137 = vst [vmem:[%s3 + $0x4] sm:$0xf] %v135
    $region25: #{transformer_layer_forward.4} parent=1 // pred_fallthru
      _
    // Predicated region
    $region26: #{transformer_layer_forward.4} parent=1 // pred_check
      _
    $region27: #{transformer_layer_forward.4} parent=1 // pred_check_branch
      %139 = sbr.rel (0) target = $region29
    $region28: #{transformer_layer_forward.4} parent=1 // pred_region
      _
    $region29: #{transformer_layer_forward.4} parent=1 // pred_fallthru
      _
    // Predicated region
    $region30: #{transformer_layer_forward.4} parent=1 // pred_check
      _
    $region31: #{transformer_layer_forward.4} parent=1 // pred_check_branch
      %141 = sbr.rel (0) target = $region33
    $region32: #{transformer_layer_forward.4} parent=1 // pred_region
      _
    $region33: #{transformer_layer_forward.4} parent=1 // pred_fallthru
      _
    %142 = vsyncpa [#allocation4], 1

// kernel: transformer_layer_forward.6
$region0: #{transformer_layer_forward.6}
  #allocation0 [shape = 'u32[]', space=smem, size = 0x4, offset = 0x4, fixed_abs, tag = 'smem constant byte address 0x4 - core index']
  #allocation1 [shape = 'u32[72,128]{1,0:T(1,128)}', space=vmem, size = 0x9000, scoped, tag = 'internal scratch']
  #allocation2 [shape = 'f32[16,128]{1,0:T(8,128)}', space=vmem, size = 0x2000, scoped, tag = 'scratch operand']
  %s0 = inlined_call_operand.vmem [shape: bf16[16,128], index: 0, kind: input, shape index: {}]
  %s1 = inlined_call_operand.vmem [shape: bf16[128,128], index: 1, kind: input, shape index: {}]
  %s2 = inlined_call_operand.vmem [shape: f32[1,128], index: 2, kind: input, shape index: {}]
  %s3 = inlined_call_operand.vmem [shape: f32[16,128], index: 3, kind: input, shape index: {}]
  %s4 = inlined_call_operand.vmem [shape: f32[16,128], index: 4, kind: output, shape index: {}]
  %s5 = sld [smem:[#allocation0]]
  $region34: #{transformer_layer_forward.6} parent=0
    _
  %s7 = ssub.s32 1, %s5
  %s8 = scalar_select 0, %s7, %s5
  // Predicated region
  $region2: #{transformer_layer_forward.6} parent=0 // pred_check
    _
  $region3: #{transformer_layer_forward.6} parent=0 // pred_check_branch
    %10 = sbr.rel (0) target = $region5
  $region4: #{transformer_layer_forward.6} parent=0 // pred_region
    _
  $region5: #{transformer_layer_forward.6} parent=0 // pred_fallthru
    _
  // Predicated region
  $region6: #{transformer_layer_forward.6} parent=0 // pred_check
    _
  $region7: #{transformer_layer_forward.6} parent=0 // pred_check_branch
    %12 = sbr.rel (0) target = $region9
  $region8: #{transformer_layer_forward.6} parent=0 // pred_region
    _
  $region9: #{transformer_layer_forward.6} parent=0 // pred_fallthru
    _
  // Predicated region
  $region10: #{transformer_layer_forward.6} parent=0 // pred_check
    _
  $region11: #{transformer_layer_forward.6} parent=0 // pred_check_branch
    %14 = sbr.rel (0) target = $region13
  $region12: #{transformer_layer_forward.6} parent=0 // pred_region
    _
  $region13: #{transformer_layer_forward.6} parent=0 // pred_fallthru
    _
  // Predicated region
  $region14: #{transformer_layer_forward.6} parent=0 // pred_check
    _
  $region15: #{transformer_layer_forward.6} parent=0 // pred_check_branch
    %16 = sbr.rel (0) target = $region17
  $region16: #{transformer_layer_forward.6} parent=0 // pred_region
    _
  $region17: #{transformer_layer_forward.6} parent=0 // pred_fallthru
    _
  %p17 = scmp.eq.s32.totalorder 0, 0
  // Predicated region
  $region18: #{transformer_layer_forward.6} parent=0 // pred_check
    %p18 = pneg %p17
  $region19: #{transformer_layer_forward.6} parent=0 // pred_check_branch
    %20 = sbr.rel (%p18) target = $region21
  $region20: #{transformer_layer_forward.6} parent=0 // pred_region
    %21 = vst [vmem:[#allocation2] sm:$0xff] 0.0
    %22 = vst [vmem:[#allocation2 + $0x8] sm:$0xff] 0.0
  $region21: #{transformer_layer_forward.6} parent=0 // pred_fallthru
    _
  %v23 = vld [vmem:[#allocation2] sm:$0xff]
  %v24 = vld [vmem:[#allocation2 + $0x8] sm:$0xff]
  %v25 = vld [vmem:[%s0] sm:$0xf]
  %v26 = vld [vmem:[%s0 + $0x4] sm:$0xf]
  %v27 = vld [vmem:[%s1] sm:$0xf]
  %v28 = vld [vmem:[%s1 + $0x4] sm:$0xf]
  %v29 = vld [vmem:[%s1 + $0x8] sm:$0xf]
  %v30 = vld [vmem:[%s1 + $0xc] sm:$0xf]
  %v31 = vld [vmem:[%s1 + $0x10] sm:$0xf]
  %v32 = vld [vmem:[%s1 + $0x14] sm:$0xf]
  %v33 = vld [vmem:[%s1 + $0x18] sm:$0xf]
  %v34 = vld [vmem:[%s1 + $0x1c] sm:$0xf]
  %v35 = vld [vmem:[%s1 + $0x20] sm:$0xf]
  %v36 = vld [vmem:[%s1 + $0x24] sm:$0xf]
  %v37 = vld [vmem:[%s1 + $0x28] sm:$0xf]
  %v38 = vld [vmem:[%s1 + $0x2c] sm:$0xf]
  %v39 = vld [vmem:[%s1 + $0x30] sm:$0xf]
  %v40 = vld [vmem:[%s1 + $0x34] sm:$0xf]
  %v41 = vld [vmem:[%s1 + $0x38] sm:$0xf]
  %v42 = vld [vmem:[%s1 + $0x3c] sm:$0xf]
  %v45 = vunpack.c.l.b16 %v25
  %v46 = vunpack.c.l.b16 %v26
  %v47 = vpack.c.b16 %v46, %v45
  %v65 = vunpack.c.l.b16 %v27
  %v66 = vunpack.c.l.b16 %v28
  %v67 = vunpack.c.l.b16 %v29
  %v68 = vunpack.c.l.b16 %v30
  %v69 = vunpack.c.l.b16 %v31
  %v70 = vunpack.c.l.b16 %v32
  %v71 = vunpack.c.l.b16 %v33
  %v72 = vunpack.c.l.b16 %v34
  %v73 = vunpack.c.l.b16 %v35
  %v74 = vunpack.c.l.b16 %v36
  %v75 = vunpack.c.l.b16 %v37
  %v76 = vunpack.c.l.b16 %v38
  %v77 = vunpack.c.l.b16 %v39
  %v78 = vunpack.c.l.b16 %v40
  %v79 = vunpack.c.l.b16 %v41
  %v80 = vunpack.c.l.b16 %v42
  %v81 = vpack.c.b16 %v66, %v65
  %v82 = vpack.c.b16 %v68, %v67
  %v83 = vpack.c.b16 %v70, %v69
  %v84 = vpack.c.b16 %v72, %v71
  %v85 = vpack.c.b16 %v74, %v73
  %v86 = vpack.c.b16 %v76, %v75
  %v87 = vpack.c.b16 %v78, %v77
  %v88 = vpack.c.b16 %v80, %v79
  %97 = vmatpush.bf16.msra.mxu0 %v88
  %98 = vmatpush.bf16.msra.mxu0 %v87
  %99 = vmatpush.bf16.msra.mxu0 %v86
  %100 = vmatpush.bf16.msra.mxu0 %v85
  %101 = vmatpush.bf16.msra.mxu0 %v84
  %102 = vmatpush.bf16.msra.mxu0 %v83
  %103 = vmatpush.bf16.msra.mxu0 %v82
  %104 = vmatpush.bf16.msra.mxu0 %v81
  %105 = vmatmul.bf16.gmra.mxu0 %v47
  %v106 = vpop.f32.mrf.mxu0
  %v107 = vadd.f32 0.0, %v106
  %v108 = vpop.f32.mrf.mxu0
  %v109 = vadd.f32 0.0, %v108
  %110 = vdwg.mxu0
  %v111 = vadd.f32 %v23, %v107
  %v112 = vadd.f32 %v24, %v109
  %113 = vst [vmem:[#allocation2] sm:$0xff] %v111
  %114 = vst [vmem:[#allocation2 + $0x8] sm:$0xff] %v112
  // Predicated region
  $region22: #{transformer_layer_forward.6} parent=0 // pred_check
    %p115 = pneg %p17
  $region23: #{transformer_layer_forward.6} parent=0 // pred_check_branch
    %117 = sbr.rel (%p115) target = $region25
  $region24: #{transformer_layer_forward.6} parent=0 // pred_region
    %v118 = vld [vmem:[#allocation2] sm:$0xff]
    %v119 = vld [vmem:[#allocation2 + $0x8] sm:$0xff]
    %v120 = vld [vmem:[%s2] sm:$0x1]
    %v122 = vperm.slane %v120, 0
    %v124 = vadd.f32 %v118, %v122
    %v125 = vadd.f32 %v119, %v122
    %v126 = vld [vmem:[%s3] sm:$0xff]
    %v127 = vld [vmem:[%s3 + $0x8] sm:$0xff]
    %v128 = vadd.f32 %v124, %v126
    %v129 = vadd.f32 %v125, %v127
    %130 = vst [vmem:[%s4] sm:$0xff] %v128
    %131 = vst [vmem:[%s4 + $0x8] sm:$0xff] %v129
  $region25: #{transformer_layer_forward.6} parent=0 // pred_fallthru
    _
  // Predicated region
  $region26: #{transformer_layer_forward.6} parent=0 // pred_check
    _
  $region27: #{transformer_layer_forward.6} parent=0 // pred_check_branch
    %133 = sbr.rel (0) target = $region29
  $region28: #{transformer_layer_forward.6} parent=0 // pred_region
    _
  $region29: #{transformer_layer_forward.6} parent=0 // pred_fallthru
    _
  // Predicated region
  $region30: #{transformer_layer_forward.6} parent=0 // pred_check
    _
  $region31: #{transformer_layer_forward.6} parent=0 // pred_check_branch
    %135 = sbr.rel (0) target = $region33
  $region32: #{transformer_layer_forward.6} parent=0 // pred_region
    _
  $region33: #{transformer_layer_forward.6} parent=0 // pred_fallthru
    _

// kernel: transformer_layer_forward.7
$region0: #{transformer_layer_forward.7}
  #allocation0 [shape = 'u32[]', space=smem, size = 0x4, offset = 0x4, fixed_abs, tag = 'smem constant byte address 0x4 - core index']
  #allocation1 [shape = 'u32[72,128]{1,0:T(1,128)}', space=vmem, size = 0x9000, scoped, tag = 'internal scratch']
  #allocation2 [shape = 'f32[16,128]{1,0:T(8,128)}', space=vmem, size = 0x2000, scoped, tag = 'scratch operand']
  %s0 = inlined_call_operand.vmem [shape: f32[16,128], index: 0, kind: input, shape index: {}]
  %s1 = inlined_call_operand.vmem [shape: bf16[128,128], index: 1, kind: input, shape index: {}]
  %s2 = inlined_call_operand.vmem [shape: f32[1,128], index: 2, kind: input, shape index: {}]
  %s3 = inlined_call_operand.vmem [shape: bf16[128,128], index: 3, kind: input, shape index: {}]
  %s4 = inlined_call_operand.vmem [shape: f32[1,128], index: 4, kind: input, shape index: {}]
  %s5 = inlined_call_operand.vmem [shape: f32[16,128], index: 5, kind: output, shape index: {}]
  %s6 = sld [smem:[#allocation0]]
  $region38: #{transformer_layer_forward.7} parent=0
    _
  %s8 = ssub.s32 1, %s6
  %s9 = scalar_select 0, %s8, %s6
  // Predicated region
  $region2: #{transformer_layer_forward.7} parent=0 // pred_check
    _
  $region3: #{transformer_layer_forward.7} parent=0 // pred_check_branch
    %11 = sbr.rel (0) target = $region5
  $region4: #{transformer_layer_forward.7} parent=0 // pred_region
    _
  $region5: #{transformer_layer_forward.7} parent=0 // pred_fallthru
    _
  // Predicated region
  $region6: #{transformer_layer_forward.7} parent=0 // pred_check
    _
  $region7: #{transformer_layer_forward.7} parent=0 // pred_check_branch
    %13 = sbr.rel (0) target = $region9
  $region8: #{transformer_layer_forward.7} parent=0 // pred_region
    _
  $region9: #{transformer_layer_forward.7} parent=0 // pred_fallthru
    _
  // Predicated region
  $region10: #{transformer_layer_forward.7} parent=0 // pred_check
    _
  $region11: #{transformer_layer_forward.7} parent=0 // pred_check_branch
    %15 = sbr.rel (0) target = $region13
  $region12: #{transformer_layer_forward.7} parent=0 // pred_region
    _
  $region13: #{transformer_layer_forward.7} parent=0 // pred_fallthru
    _
  // Predicated region
  $region14: #{transformer_layer_forward.7} parent=0 // pred_check
    _
  $region15: #{transformer_layer_forward.7} parent=0 // pred_check_branch
    %17 = sbr.rel (0) target = $region17
  $region16: #{transformer_layer_forward.7} parent=0 // pred_region
    _
  $region17: #{transformer_layer_forward.7} parent=0 // pred_fallthru
    _
  // Predicated region
  $region18: #{transformer_layer_forward.7} parent=0 // pred_check
    _
  $region19: #{transformer_layer_forward.7} parent=0 // pred_check_branch
    %19 = sbr.rel (0) target = $region21
  $region20: #{transformer_layer_forward.7} parent=0 // pred_region
    _
  $region21: #{transformer_layer_forward.7} parent=0 // pred_fallthru
    _
  %p20 = scmp.eq.s32.totalorder 0, 0
  // Predicated region
  $region22: #{transformer_layer_forward.7} parent=0 // pred_check
    %p21 = pneg %p20
  $region23: #{transformer_layer_forward.7} parent=0 // pred_check_branch
    %23 = sbr.rel (%p21) target = $region25
  $region24: #{transformer_layer_forward.7} parent=0 // pred_region
    %24 = vst [vmem:[#allocation2] sm:$0xff] 0.0
    %25 = vst [vmem:[#allocation2 + $0x8] sm:$0xff] 0.0
  $region25: #{transformer_layer_forward.7} parent=0 // pred_fallthru
    _
  %v26 = vld [vmem:[%s0] sm:$0xff]
  %v27 = vld [vmem:[%s0 + $0x8] sm:$0xff]
  %v28 = vpack.c.bf16 %v27, %v26
  %v29 = vld [vmem:[%s1] sm:$0xf]
  %v30 = vld [vmem:[%s1 + $0x4] sm:$0xf]
  %v31 = vld [vmem:[%s1 + $0x8] sm:$0xf]
  %v32 = vld [vmem:[%s1 + $0xc] sm:$0xf]
  %v33 = vld [vmem:[%s1 + $0x10] sm:$0xf]
  %v34 = vld [vmem:[%s1 + $0x14] sm:$0xf]
  %v35 = vld [vmem:[%s1 + $0x18] sm:$0xf]
  %v36 = vld [vmem:[%s1 + $0x1c] sm:$0xf]
  %v37 = vld [vmem:[%s1 + $0x20] sm:$0xf]
  %v38 = vld [vmem:[%s1 + $0x24] sm:$0xf]
  %v39 = vld [vmem:[%s1 + $0x28] sm:$0xf]
  %v40 = vld [vmem:[%s1 + $0x2c] sm:$0xf]
  %v41 = vld [vmem:[%s1 + $0x30] sm:$0xf]
  %v42 = vld [vmem:[%s1 + $0x34] sm:$0xf]
  %v43 = vld [vmem:[%s1 + $0x38] sm:$0xf]
  %v44 = vld [vmem:[%s1 + $0x3c] sm:$0xf]
  %v45 = vld [vmem:[%s2] sm:$0x1]
  %v47 = vperm.slane %v45, 0
  %v65 = vunpack.c.l.b16 %v29
  %v66 = vunpack.c.l.b16 %v30
  %v67 = vunpack.c.l.b16 %v31
  %v68 = vunpack.c.l.b16 %v32
  %v69 = vunpack.c.l.b16 %v33
  %v70 = vunpack.c.l.b16 %v34
  %v71 = vunpack.c.l.b16 %v35
  %v72 = vunpack.c.l.b16 %v36
  %v73 = vunpack.c.l.b16 %v37
  %v74 = vunpack.c.l.b16 %v38
  %v75 = vunpack.c.l.b16 %v39
  %v76 = vunpack.c.l.b16 %v40
  %v77 = vunpack.c.l.b16 %v41
  %v78 = vunpack.c.l.b16 %v42
  %v79 = vunpack.c.l.b16 %v43
  %v80 = vunpack.c.l.b16 %v44
  %v81 = vpack.c.b16 %v66, %v65
  %v82 = vpack.c.b16 %v68, %v67
  %v83 = vpack.c.b16 %v70, %v69
  %v84 = vpack.c.b16 %v72, %v71
  %v85 = vpack.c.b16 %v74, %v73
  %v86 = vpack.c.b16 %v76, %v75
  %v87 = vpack.c.b16 %v78, %v77
  %v88 = vpack.c.b16 %v80, %v79
  %97 = vmatpush.bf16.msra.mxu0 %v88
  %98 = vmatpush.bf16.msra.mxu0 %v87
  %99 = vmatpush.bf16.msra.mxu0 %v86
  %100 = vmatpush.bf16.msra.mxu0 %v85
  %101 = vmatpush.bf16.msra.mxu0 %v84
  %102 = vmatpush.bf16.msra.mxu0 %v83
  %103 = vmatpush.bf16.msra.mxu0 %v82
  %104 = vmatpush.bf16.msra.mxu0 %v81
  %105 = vmatmul.bf16.gmra.mxu0 %v28
  %v106 = vpop.f32.mrf.mxu0
  %v107 = vadd.f32 %v47, %v106
  %v108 = vpop.f32.mrf.mxu0
  %v109 = vadd.f32 %v47, %v108
  %110 = vdwg.mxu0
  %v111 = vmul.f32 %v107, 0.5
  %v112 = vmul.f32 %v109, 0.5
  %v113 = vmul.f32 %v107, 0.70710677
  %v114 = vmul.f32 %v109, 0.70710677
  %v115 = vmul.f32 %v113, %v113
  %v116 = vmin.f32 16.0, %v115
  %v117 = vmul.f32 %v116, 2.1237322e-06
  %v118 = vadd.f32 %v117, 0.00028619796
  %v119 = vmul.f32 %v116, %v118
  %v120 = vadd.f32 %v119, 0.0036580483
  %v121 = vmul.f32 %v116, %v120
  %v122 = vadd.f32 %v121, 0.05243302
  %v123 = vmul.f32 %v116, %v122
  %v124 = vadd.f32 %v123, 0.18741608
  %v125 = vmul.f32 %v116, %v124
  %v126 = vadd.f32 %v125, 1.1283791
  %v127 = vmul.f32 %v113, %v126
  %v128 = vmul.f32 %v116, 3.8918573e-05
  %v129 = vadd.f32 %v128, 0.001143296
  %v130 = vmul.f32 %v116, %v129
  %v131 = vadd.f32 %v130, 0.014752088
  %v132 = vmul.f32 %v116, %v131
  %v133 = vadd.f32 %v132, 0.112945676
  %v134 = vmul.f32 %v116, %v133
  %v135 = vadd.f32 %v134, 0.4994258
  %v136 = vmul.f32 %v116, %v135
  %v137 = vadd.f32 %v136, 1.0
  %v138 = vrcp.pop %v137
  %v139 = vmul.f32 %v137, %v138
  %v140 = vsub.f32 1.0, %v139
  %v141 = vmul.f32 %v138, %v140
  %v142 = vadd.f32 %v138, %v141
  %vm143 = vweird.f32 %v137
  %vm144 = vweird.f32 %v138
  %vm145 = vmor %vm143, %vm144
  %v146 = vsel %vm145, %v138, %v142
  %v147 = vand.u32 2147483647, %v137
  %vm148 = vcmp.eq.f32.partialorder %v147, 8.507059e+37
  %v149 = vand.u32 %v137, 2147483648
  %v150 = vor.u32 1.1754944e-38, %v149
  %v151 = vsel %vm148, %v150, %v146
  %v152 = vmul.f32 %v127, %v151
  %v153 = vmin.f32 %v152, 1.0
  %v154 = vmax.f32 %v153, -1.0
  %v155 = vmul.f32 %v114, %v114
  %v156 = vmin.f32 16.0, %v155
  %v157 = vmul.f32 %v156, 2.1237322e-06
  %v158 = vadd.f32 %v157, 0.00028619796
  %v159 = vmul.f32 %v156, %v158
  %v160 = vadd.f32 %v159, 0.0036580483
  %v161 = vmul.f32 %v156, %v160
  %v162 = vadd.f32 %v161, 0.05243302
  %v163 = vmul.f32 %v156, %v162
  %v164 = vadd.f32 %v163, 0.18741608
  %v165 = vmul.f32 %v156, %v164
  %v166 = vadd.f32 %v165, 1.1283791
  %v167 = vmul.f32 %v114, %v166
  %v168 = vmul.f32 %v156, 3.8918573e-05
  %v169 = vadd.f32 %v168, 0.001143296
  %v170 = vmul.f32 %v156, %v169
  %v171 = vadd.f32 %v170, 0.014752088
  %v172 = vmul.f32 %v156, %v171
  %v173 = vadd.f32 %v172, 0.112945676
  %v174 = vmul.f32 %v156, %v173
  %v175 = vadd.f32 %v174, 0.4994258
  %v176 = vmul.f32 %v156, %v175
  %v177 = vadd.f32 %v176, 1.0
  %v178 = vrcp.pop %v177
  %v179 = vmul.f32 %v177, %v178
  %v180 = vsub.f32 1.0, %v179
  %v181 = vmul.f32 %v178, %v180
  %v182 = vadd.f32 %v178, %v181
  %vm183 = vweird.f32 %v177
  %vm184 = vweird.f32 %v178
  %vm185 = vmor %vm183, %vm184
  %v186 = vsel %vm185, %v178, %v182
  %v187 = vand.u32 2147483647, %v177
  %vm188 = vcmp.eq.f32.partialorder %v187, 8.507059e+37
  %v189 = vand.u32 %v177, 2147483648
  %v190 = vor.u32 1.1754944e-38, %v189
  %v191 = vsel %vm188, %v190, %v186
  %v192 = vmul.f32 %v167, %v191
  %v193 = vmin.f32 %v192, 1.0
  %v194 = vmax.f32 %v193, -1.0
  %v195 = vadd.f32 %v154, 1.0
  %v196 = vadd.f32 %v194, 1.0
  %v197 = vmul.f32 %v111, %v195
  %v198 = vmul.f32 %v112, %v196
  %v199 = vld [vmem:[#allocation2] sm:$0xff]
  %v200 = vld [vmem:[#allocation2 + $0x8] sm:$0xff]
  %v201 = vpack.c.bf16 %v198, %v197
  %v202 = vld [vmem:[%s3] sm:$0xf]
  %v203 = vld [vmem:[%s3 + $0x4] sm:$0xf]
  %v204 = vld [vmem:[%s3 + $0x8] sm:$0xf]
  %v205 = vld [vmem:[%s3 + $0xc] sm:$0xf]
  %v206 = vld [vmem:[%s3 + $0x10] sm:$0xf]
  %v207 = vld [vmem:[%s3 + $0x14] sm:$0xf]
  %v208 = vld [vmem:[%s3 + $0x18] sm:$0xf]
  %v209 = vld [vmem:[%s3 + $0x1c] sm:$0xf]
  %v210 = vld [vmem:[%s3 + $0x20] sm:$0xf]
  %v211 = vld [vmem:[%s3 + $0x24] sm:$0xf]
  %v212 = vld [vmem:[%s3 + $0x28] sm:$0xf]
  %v213 = vld [vmem:[%s3 + $0x2c] sm:$0xf]
  %v214 = vld [vmem:[%s3 + $0x30] sm:$0xf]
  %v215 = vld [vmem:[%s3 + $0x34] sm:$0xf]
  %v216 = vld [vmem:[%s3 + $0x38] sm:$0xf]
  %v217 = vld [vmem:[%s3 + $0x3c] sm:$0xf]
  %v234 = vunpack.c.l.b16 %v202
  %v235 = vunpack.c.l.b16 %v203
  %v236 = vunpack.c.l.b16 %v204
  %v237 = vunpack.c.l.b16 %v205
  %v238 = vunpack.c.l.b16 %v206
  %v239 = vunpack.c.l.b16 %v207
  %v240 = vunpack.c.l.b16 %v208
  %v241 = vunpack.c.l.b16 %v209
  %v242 = vunpack.c.l.b16 %v210
  %v243 = vunpack.c.l.b16 %v211
  %v244 = vunpack.c.l.b16 %v212
  %v245 = vunpack.c.l.b16 %v213
  %v246 = vunpack.c.l.b16 %v214
  %v247 = vunpack.c.l.b16 %v215
  %v248 = vunpack.c.l.b16 %v216
  %v249 = vunpack.c.l.b16 %v217
  %v250 = vpack.c.b16 %v235, %v234
  %v251 = vpack.c.b16 %v237, %v236
  %v252 = vpack.c.b16 %v239, %v238
  %v253 = vpack.c.b16 %v241, %v240
  %v254 = vpack.c.b16 %v243, %v242
  %v255 = vpack.c.b16 %v245, %v244
  %v256 = vpack.c.b16 %v247, %v246
  %v257 = vpack.c.b16 %v249, %v248
  %266 = vmatpush.bf16.msra.mxu0 %v257
  %267 = vmatpush.bf16.msra.mxu0 %v256
  %268 = vmatpush.bf16.msra.mxu0 %v255
  %269 = vmatpush.bf16.msra.mxu0 %v254
  %270 = vmatpush.bf16.msra.mxu0 %v253
  %271 = vmatpush.bf16.msra.mxu0 %v252
  %272 = vmatpush.bf16.msra.mxu0 %v251
  %273 = vmatpush.bf16.msra.mxu0 %v250
  %274 = vmatmul.bf16.gmra.mxu0 %v201
  %v275 = vpop.f32.mrf.mxu0
  %v276 = vadd.f32 0.0, %v275
  %v277 = vpop.f32.mrf.mxu0
  %v278 = vadd.f32 0.0, %v277
  %279 = vdwg.mxu0
  %v280 = vadd.f32 %v199, %v276
  %v281 = vadd.f32 %v200, %v278
  %282 = vst [vmem:[#allocation2] sm:$0xff] %v280
  %283 = vst [vmem:[#allocation2 + $0x8] sm:$0xff] %v281
  // Predicated region
  $region26: #{transformer_layer_forward.7} parent=0 // pred_check
    %p284 = pneg %p20
  $region27: #{transformer_layer_forward.7} parent=0 // pred_check_branch
    %286 = sbr.rel (%p284) target = $region29
  $region28: #{transformer_layer_forward.7} parent=0 // pred_region
    %v287 = vld [vmem:[#allocation2] sm:$0xff]
    %v288 = vld [vmem:[#allocation2 + $0x8] sm:$0xff]
    %v289 = vld [vmem:[%s4] sm:$0x1]
    %v291 = vperm.slane %v289, 0
    %v293 = vadd.f32 %v287, %v291
    %v294 = vadd.f32 %v288, %v291
    %v295 = vld [vmem:[%s0] sm:$0xff]
    %v296 = vld [vmem:[%s0 + $0x8] sm:$0xff]
    %v297 = vadd.f32 %v293, %v295
    %v298 = vadd.f32 %v294, %v296
    %299 = vst [vmem:[%s5] sm:$0xff] %v297
    %300 = vst [vmem:[%s5 + $0x8] sm:$0xff] %v298
  $region29: #{transformer_layer_forward.7} parent=0 // pred_fallthru
    _
  // Predicated region
  $region30: #{transformer_layer_forward.7} parent=0 // pred_check
    _
  $region31: #{transformer_layer_forward.7} parent=0 // pred_check_branch
    %302 = sbr.rel (0) target = $region33
  $region32: #{transformer_layer_forward.7} parent=0 // pred_region
    _
  $region33: #{transformer_layer_forward.7} parent=0 // pred_fallthru
    _
  // Predicated region
  $region34: #{transformer_layer_forward.7} parent=0 // pred_check
    _
  $region35: #{transformer_layer_forward.7} parent=0 // pred_check_branch
    %304 = sbr.rel (0) target = $region37
  $region36: #{transformer_layer_forward.7} parent=0 // pred_region
    _
  $region37: #{transformer_layer_forward.7} parent=0 // pred_fallthru
    _

// kernel: transformer_layer_forward.5
$region0: #{transformer_layer_forward.5}
  #allocation0 [shape = 'u32[]', space=smem, size = 0x4, offset = 0x4, fixed_abs, tag = 'smem constant byte address 0x4 - core index']
  #allocation1 [shape = 'u32[72,128]{1,0:T(1,128)}', space=vmem, size = 0x9000, scoped, tag = 'internal scratch']
  #allocation2 [shape = 'f32[8,8,1]{2,1,0:T(8,128)}', space=vmem, size = 0x8000, scoped, tag = 'scratch operand']
  #allocation3 [shape = 'f32[8,8,1]{2,1,0:T(8,128)}', space=vmem, size = 0x8000, scoped, tag = 'scratch operand']
  #allocation4 [shape = 'f32[8,8,8]{2,1,0:T(8,128)}', space=vmem, size = 0x8000, scoped, tag = 'scratch operand']
  %s0 = inlined_call_operand.vmem [shape: bf16[8,8,8], index: 0, kind: input, shape index: {}]
  %s1 = inlined_call_operand.vmem [shape: bf16[8,8,8], index: 1, kind: input, shape index: {}]
  %s2 = inlined_call_operand.vmem [shape: bf16[8,8,8], index: 2, kind: input, shape index: {}]
  %s3 = inlined_call_operand.vmem [shape: bf16[8,8,8], index: 3, kind: output, shape index: {}]
  %s4 = sld [smem:[#allocation0]]
  $region30: #{transformer_layer_forward.5} parent=0
    _
  %s6 = ssub.s32 1, %s4
  %s7 = scalar_select 0, %s6, %s4
  // Predicated region
  $region2: #{transformer_layer_forward.5} parent=0 // pred_check
    _
  $region3: #{transformer_layer_forward.5} parent=0 // pred_check_branch
    %9 = sbr.rel (0) target = $region5
  $region4: #{transformer_layer_forward.5} parent=0 // pred_region
    _
  $region5: #{transformer_layer_forward.5} parent=0 // pred_fallthru
    _
  // Predicated region
  $region6: #{transformer_layer_forward.5} parent=0 // pred_check
    _
  $region7: #{transformer_layer_forward.5} parent=0 // pred_check_branch
    %11 = sbr.rel (0) target = $region9
  $region8: #{transformer_layer_forward.5} parent=0 // pred_region
    _
  $region9: #{transformer_layer_forward.5} parent=0 // pred_fallthru
    _
  // Predicated region
  $region10: #{transformer_layer_forward.5} parent=0 // pred_check
    _
  $region11: #{transformer_layer_forward.5} parent=0 // pred_check_branch
    %13 = sbr.rel (0) target = $region13
  $region12: #{transformer_layer_forward.5} parent=0 // pred_region
    _
  $region13: #{transformer_layer_forward.5} parent=0 // pred_fallthru
    _
  %p15 = scmp.eq.s32.totalorder 0, 0
  // Predicated region
  $region14: #{transformer_layer_forward.5} parent=0 // pred_check
    %p16 = pneg %p15
  $region15: #{transformer_layer_forward.5} parent=0 // pred_check_branch
    %18 = sbr.rel (%p16) target = $region17
  $region16: #{transformer_layer_forward.5} parent=0 // pred_region
    %vm19 = vcmask 7168
    %20 = vst.msk [vmem:[#allocation2] sm:$0xff] %vm19, -1e+30
    %21 = vst.msk [vmem:[#allocation2 + $0x8] sm:$0xff] %vm19, -1e+30
    %22 = vst.msk [vmem:[#allocation2 + $0x10] sm:$0xff] %vm19, -1e+30
    %23 = vst.msk [vmem:[#allocation2 + $0x18] sm:$0xff] %vm19, -1e+30
    %24 = vst.msk [vmem:[#allocation2 + $0x20] sm:$0xff] %vm19, -1e+30
    %25 = vst.msk [vmem:[#allocation2 + $0x28] sm:$0xff] %vm19, -1e+30
    %26 = vst.msk [vmem:[#allocation2 + $0x30] sm:$0xff] %vm19, -1e+30
    %27 = vst.msk [vmem:[#allocation2 + $0x38] sm:$0xff] %vm19, -1e+30
    %28 = vst.msk [vmem:[#allocation3] sm:$0xff] %vm19, 0.0
    %29 = vst.msk [vmem:[#allocation3 + $0x8] sm:$0xff] %vm19, 0.0
    %30 = vst.msk [vmem:[#allocation3 + $0x10] sm:$0xff] %vm19, 0.0
    %31 = vst.msk [vmem:[#allocation3 + $0x18] sm:$0xff] %vm19, 0.0
    %32 = vst.msk [vmem:[#allocation3 + $0x20] sm:$0xff] %vm19, 0.0
    %33 = vst.msk [vmem:[#allocation3 + $0x28] sm:$0xff] %vm19, 0.0
    %34 = vst.msk [vmem:[#allocation3 + $0x30] sm:$0xff] %vm19, 0.0
    %35 = vst.msk [vmem:[#allocation3 + $0x38] sm:$0xff] %vm19, 0.0
    %vm36 = vcmask 64512
    %37 = vst.msk [vmem:[#allocation4] sm:$0xff] %vm36, 0.0
    %38 = vst.msk [vmem:[#allocation4 + $0x8] sm:$0xff] %vm36, 0.0
    %39 = vst.msk [vmem:[#allocation4 + $0x10] sm:$0xff] %vm36, 0.0
    %40 = vst.msk [vmem:[#allocation4 + $0x18] sm:$0xff] %vm36, 0.0
    %41 = vst.msk [vmem:[#allocation4 + $0x20] sm:$0xff] %vm36, 0.0
    %42 = vst.msk [vmem:[#allocation4 + $0x28] sm:$0xff] %vm36, 0.0
    %43 = vst.msk [vmem:[#allocation4 + $0x30] sm:$0xff] %vm36, 0.0
    %44 = vst.msk [vmem:[#allocation4 + $0x38] sm:$0xff] %vm36, 0.0
  $region17: #{transformer_layer_forward.5} parent=0 // pred_fallthru
    _
  %v45 = vld [vmem:[%s0] sm:$0xf]
  %v46 = vld [vmem:[%s0 + $0x4] sm:$0xf]
  %v47 = vld [vmem:[%s0 + $0x8] sm:$0xf]
  %v48 = vld [vmem:[%s0 + $0xc] sm:$0xf]
  %v49 = vld [vmem:[%s0 + $0x10] sm:$0xf]
  %v50 = vld [vmem:[%s0 + $0x14] sm:$0xf]
  %v51 = vld [vmem:[%s0 + $0x18] sm:$0xf]
  %v52 = vld [vmem:[%s0 + $0x1c] sm:$0xf]
  %v53 = vld [vmem:[%s1] sm:$0xf]
  %v54 = vld [vmem:[%s1 + $0x4] sm:$0xf]
  %v55 = vld [vmem:[%s1 + $0x8] sm:$0xf]
  %v56 = vld [vmem:[%s1 + $0xc] sm:$0xf]
  %v57 = vld [vmem:[%s1 + $0x10] sm:$0xf]
  %v58 = vld [vmem:[%s1 + $0x14] sm:$0xf]
  %v59 = vld [vmem:[%s1 + $0x18] sm:$0xf]
  %v60 = vld [vmem:[%s1 + $0x1c] sm:$0xf]
  %vm61 = vcmask 64512
  %v63 = vsel %vm61, %v45, 0
  %v66 = vsel %vm61, %v53, 0
  %68 = vmatpush.bf16.xpose.msra.mxu0 0
  %69 = vmatpush.bf16.xpose.msra.mxu0 0
  %70 = vmatpush.bf16.xpose.msra.mxu0 0
  %71 = vmatpush.bf16.xpose.msra.mxu0 0
  %72 = vmatpush.bf16.xpose.msra.mxu0 0
  %73 = vmatpush.bf16.xpose.msra.mxu0 0
  %74 = vmatpush.bf16.xpose.msra.mxu0 0
  %75 = vmatpush.bf16.xpose.msra.mxu0 %v66
  %76 = vmatmul.bf16.gmra.mxu0 %v63
  %v77 = vpop.f32.mrf.mxu0
  %v78 = vadd.f32 0.0, %v77
  %v79 = vpop.f32.mrf.mxu0
  %80 = vdwg.mxu0
  %v82 = vsel %vm61, %v46, 0
  %v85 = vsel %vm61, %v54, 0
  %87 = vmatpush.bf16.xpose.msra.mxu0 0
  %88 = vmatpush.bf16.xpose.msra.mxu0 0
  %89 = vmatpush.bf16.xpose.msra.mxu0 0
  %90 = vmatpush.bf16.xpose.msra.mxu0 0
  %91 = vmatpush.bf16.xpose.msra.mxu0 0
  %92 = vmatpush.bf16.xpose.msra.mxu0 0
  %93 = vmatpush.bf16.xpose.msra.mxu0 0
  %94 = vmatpush.bf16.xpose.msra.mxu0 %v85
  %95 = vmatmul.bf16.gmra.mxu0 %v82
  %v96 = vpop.f32.mrf.mxu0
  %v97 = vadd.f32 0.0, %v96
  %v98 = vpop.f32.mrf.mxu0
  %99 = vdwg.mxu0
  %v101 = vsel %vm61, %v47, 0
  %v104 = vsel %vm61, %v55, 0
  %106 = vmatpush.bf16.xpose.msra.mxu0 0
  %107 = vmatpush.bf16.xpose.msra.mxu0 0
  %108 = vmatpush.bf16.xpose.msra.mxu0 0
  %109 = vmatpush.bf16.xpose.msra.mxu0 0
  %110 = vmatpush.bf16.xpose.msra.mxu0 0
  %111 = vmatpush.bf16.xpose.msra.mxu0 0
  %112 = vmatpush.bf16.xpose.msra.mxu0 0
  %113 = vmatpush.bf16.xpose.msra.mxu0 %v104
  %114 = vmatmul.bf16.gmra.mxu0 %v101
  %v115 = vpop.f32.mrf.mxu0
  %v116 = vadd.f32 0.0, %v115
  %v117 = vpop.f32.mrf.mxu0
  %118 = vdwg.mxu0
  %v120 = vsel %vm61, %v48, 0
  %v123 = vsel %vm61, %v56, 0
  %125 = vmatpush.bf16.xpose.msra.mxu0 0
  %126 = vmatpush.bf16.xpose.msra.mxu0 0
  %127 = vmatpush.bf16.xpose.msra.mxu0 0
  %128 = vmatpush.bf16.xpose.msra.mxu0 0
  %129 = vmatpush.bf16.xpose.msra.mxu0 0
  %130 = vmatpush.bf16.xpose.msra.mxu0 0
  %131 = vmatpush.bf16.xpose.msra.mxu0 0
  %132 = vmatpush.bf16.xpose.msra.mxu0 %v123
  %133 = vmatmul.bf16.gmra.mxu0 %v120
  %v134 = vpop.f32.mrf.mxu0
  %v135 = vadd.f32 0.0, %v134
  %v136 = vpop.f32.mrf.mxu0
  %137 = vdwg.mxu0
  %v139 = vsel %vm61, %v49, 0
  %v142 = vsel %vm61, %v57, 0
  %144 = vmatpush.bf16.xpose.msra.mxu0 0
  %145 = vmatpush.bf16.xpose.msra.mxu0 0
  %146 = vmatpush.bf16.xpose.msra.mxu0 0
  %147 = vmatpush.bf16.xpose.msra.mxu0 0
  %148 = vmatpush.bf16.xpose.msra.mxu0 0
  %149 = vmatpush.bf16.xpose.msra.mxu0 0
  %150 = vmatpush.bf16.xpose.msra.mxu0 0
  %151 = vmatpush.bf16.xpose.msra.mxu0 %v142
  %152 = vmatmul.bf16.gmra.mxu0 %v139
  %v153 = vpop.f32.mrf.mxu0
  %v154 = vadd.f32 0.0, %v153
  %v155 = vpop.f32.mrf.mxu0
  %156 = vdwg.mxu0
  %v158 = vsel %vm61, %v50, 0
  %v161 = vsel %vm61, %v58, 0
  %163 = vmatpush.bf16.xpose.msra.mxu0 0
  %164 = vmatpush.bf16.xpose.msra.mxu0 0
  %165 = vmatpush.bf16.xpose.msra.mxu0 0
  %166 = vmatpush.bf16.xpose.msra.mxu0 0
  %167 = vmatpush.bf16.xpose.msra.mxu0 0
  %168 = vmatpush.bf16.xpose.msra.mxu0 0
  %169 = vmatpush.bf16.xpose.msra.mxu0 0
  %170 = vmatpush.bf16.xpose.msra.mxu0 %v161
  %171 = vmatmul.bf16.gmra.mxu0 %v158
  %v172 = vpop.f32.mrf.mxu0
  %v173 = vadd.f32 0.0, %v172
  %v174 = vpop.f32.mrf.mxu0
  %175 = vdwg.mxu0
  %v177 = vsel %vm61, %v51, 0
  %v180 = vsel %vm61, %v59, 0
  %182 = vmatpush.bf16.xpose.msra.mxu0 0
  %183 = vmatpush.bf16.xpose.msra.mxu0 0
  %184 = vmatpush.bf16.xpose.msra.mxu0 0
  %185 = vmatpush.bf16.xpose.msra.mxu0 0
  %186 = vmatpush.bf16.xpose.msra.mxu0 0
  %187 = vmatpush.bf16.xpose.msra.mxu0 0
  %188 = vmatpush.bf16.xpose.msra.mxu0 0
  %189 = vmatpush.bf16.xpose.msra.mxu0 %v180
  %190 = vmatmul.bf16.gmra.mxu0 %v177
  %v191 = vpop.f32.mrf.mxu0
  %v192 = vadd.f32 0.0, %v191
  %v193 = vpop.f32.mrf.mxu0
  %194 = vdwg.mxu0
  %v196 = vsel %vm61, %v52, 0
  %v199 = vsel %vm61, %v60, 0
  %201 = vmatpush.bf16.xpose.msra.mxu0 0
  %202 = vmatpush.bf16.xpose.msra.mxu0 0
  %203 = vmatpush.bf16.xpose.msra.mxu0 0
  %204 = vmatpush.bf16.xpose.msra.mxu0 0
  %205 = vmatpush.bf16.xpose.msra.mxu0 0
  %206 = vmatpush.bf16.xpose.msra.mxu0 0
  %207 = vmatpush.bf16.xpose.msra.mxu0 0
  %208 = vmatpush.bf16.xpose.msra.mxu0 %v199
  %209 = vmatmul.bf16.gmra.mxu0 %v196
  %v210 = vpop.f32.mrf.mxu0
  %v211 = vadd.f32 0.0, %v210
  %v212 = vpop.f32.mrf.mxu0
  %213 = vdwg.mxu0
  %v214 = vld [vmem:[#allocation2] sm:$0xff]
  %v215 = vld [vmem:[#allocation2 + $0x8] sm:$0xff]
  %v216 = vld [vmem:[#allocation2 + $0x10] sm:$0xff]
  %v217 = vld [vmem:[#allocation2 + $0x18] sm:$0xff]
  %v218 = vld [vmem:[#allocation2 + $0x20] sm:$0xff]
  %v219 = vld [vmem:[#allocation2 + $0x28] sm:$0xff]
  %v220 = vld [vmem:[#allocation2 + $0x30] sm:$0xff]
  %v221 = vld [vmem:[#allocation2 + $0x38] sm:$0xff]
  %v222 = vsel %vm61, %v78, -inf
  %223 = vmax.xlane.f32.xlu0 %v222
  %v224 = vpop.xlane.xlu0 %223
  %v225 = vsel %vm61, %v97, -inf
  %226 = vmax.xlane.f32.xlu0 %v225
  %v227 = vpop.xlane.xlu0 %226
  %v228 = vsel %vm61, %v116, -inf
  %229 = vmax.xlane.f32.xlu0 %v228
  %v230 = vpop.xlane.xlu0 %229
  %v231 = vsel %vm61, %v135, -inf
  %232 = vmax.xlane.f32.xlu0 %v231
  %v233 = vpop.xlane.xlu0 %232
  %v234 = vsel %vm61, %v154, -inf
  %235 = vmax.xlane.f32.xlu0 %v234
  %v236 = vpop.xlane.xlu0 %235
  %v237 = vsel %vm61, %v173, -inf
  %238 = vmax.xlane.f32.xlu0 %v237
  %v239 = vpop.xlane.xlu0 %238
  %v240 = vsel %vm61, %v192, -inf
  %241 = vmax.xlane.f32.xlu0 %v240
  %v242 = vpop.xlane.xlu0 %241
  %v243 = vsel %vm61, %v211, -inf
  %244 = vmax.xlane.f32.xlu0 %v243
  %v245 = vpop.xlane.xlu0 %244
  %v246 = vmax.f32 %v214, %v224
  %v247 = vmax.f32 %v215, %v227
  %v248 = vmax.f32 %v216, %v230
  %v249 = vmax.f32 %v217, %v233
  %v250 = vmax.f32 %v218, %v236
  %v251 = vmax.f32 %v219, %v239
  %v252 = vmax.f32 %v220, %v242
  %v253 = vmax.f32 %v221, %v245
  %v254 = vsub.f32 %v214, %v246
  %v255 = vsub.f32 %v215, %v247
  %v256 = vsub.f32 %v216, %v248
  %v257 = vsub.f32 %v217, %v249
  %v258 = vsub.f32 %v218, %v250
  %v259 = vsub.f32 %v219, %v251
  %v260 = vsub.f32 %v220, %v252
  %v261 = vsub.f32 %v221, %v253
  %v262 = vmul.f32 %v254, 1.442695
  %v263 = vpow.pop %v262
  %v264 = vmul.f32 %v255, 1.442695
  %v265 = vpow.pop %v264
  %v266 = vmul.f32 %v256, 1.442695
  %v267 = vpow.pop %v266
  %v268 = vmul.f32 %v257, 1.442695
  %v269 = vpow.pop %v268
  %v270 = vmul.f32 %v258, 1.442695
  %v271 = vpow.pop %v270
  %v272 = vmul.f32 %v259, 1.442695
  %v273 = vpow.pop %v272
  %v274 = vmul.f32 %v260, 1.442695
  %v275 = vpow.pop %v274
  %v276 = vmul.f32 %v261, 1.442695
  %v277 = vpow.pop %v276
  %279 = vset.pattern.permute.xlu0 0
  %280 = vperm.xlu0 %279, %v246
  %v281 = vpop.permute.xlu0 %280
  %284 = vset.pattern.permute.xlu0 0
  %285 = vperm.xlu0 %284, %v247
  %v286 = vpop.permute.xlu0 %285
  %289 = vset.pattern.permute.xlu0 0
  %290 = vperm.xlu0 %289, %v248
  %v291 = vpop.permute.xlu0 %290
  %294 = vset.pattern.permute.xlu0 0
  %295 = vperm.xlu0 %294, %v249
  %v296 = vpop.permute.xlu0 %295
  %299 = vset.pattern.permute.xlu0 0
  %300 = vperm.xlu0 %299, %v250
  %v301 = vpop.permute.xlu0 %300
  %304 = vset.pattern.permute.xlu0 0
  %305 = vperm.xlu0 %304, %v251
  %v306 = vpop.permute.xlu0 %305
  %309 = vset.pattern.permute.xlu0 0
  %310 = vperm.xlu0 %309, %v252
  %v311 = vpop.permute.xlu0 %310
  %314 = vset.pattern.permute.xlu0 0
  %315 = vperm.xlu0 %314, %v253
  %v316 = vpop.permute.xlu0 %315
  %v318 = vsub.f32 %v78, %v281
  %v319 = vsub.f32 %v97, %v286
  %v320 = vsub.f32 %v116, %v291
  %v321 = vsub.f32 %v135, %v296
  %v322 = vsub.f32 %v154, %v301
  %v323 = vsub.f32 %v173, %v306
  %v324 = vsub.f32 %v192, %v311
  %v325 = vsub.f32 %v211, %v316
  %v326 = vmul.f32 %v318, 1.442695
  %v327 = vpow.pop %v326
  %v328 = vmul.f32 %v319, 1.442695
  %v329 = vpow.pop %v328
  %v330 = vmul.f32 %v320, 1.442695
  %v331 = vpow.pop %v330
  %v332 = vmul.f32 %v321, 1.442695
  %v333 = vpow.pop %v332
  %v334 = vmul.f32 %v322, 1.442695
  %v335 = vpow.pop %v334
  %v336 = vmul.f32 %v323, 1.442695
  %v337 = vpow.pop %v336
  %v338 = vmul.f32 %v324, 1.442695
  %v339 = vpow.pop %v338
  %v340 = vmul.f32 %v325, 1.442695
  %v341 = vpow.pop %v340
  %v342 = vld [vmem:[#allocation3] sm:$0xff]
  %v343 = vld [vmem:[#allocation3 + $0x8] sm:$0xff]
  %v344 = vld [vmem:[#allocation3 + $0x10] sm:$0xff]
  %v345 = vld [vmem:[#allocation3 + $0x18] sm:$0xff]
  %v346 = vld [vmem:[#allocation3 + $0x20] sm:$0xff]
  %v347 = vld [vmem:[#allocation3 + $0x28] sm:$0xff]
  %v348 = vld [vmem:[#allocation3 + $0x30] sm:$0xff]
  %v349 = vld [vmem:[#allocation3 + $0x38] sm:$0xff]
  %v350 = vmul.f32 %v263, %v342
  %v351 = vmul.f32 %v265, %v343
  %v352 = vmul.f32 %v267, %v344
  %v353 = vmul.f32 %v269, %v345
  %v354 = vmul.f32 %v271, %v346
  %v355 = vmul.f32 %v273, %v347
  %v356 = vmul.f32 %v275, %v348
  %v357 = vmul.f32 %v277, %v349
  %v358 = vsel %vm61, %v327, 0.0
  %359 = vadd.xlane.f32.xlu0 %v358
  %v360 = vpop.xlane.xlu0 %359
  %v361 = vsel %vm61, %v329, 0.0
  %362 = vadd.xlane.f32.xlu0 %v361
  %v363 = vpop.xlane.xlu0 %362
  %v364 = vsel %vm61, %v331, 0.0
  %365 = vadd.xlane.f32.xlu0 %v364
  %v366 = vpop.xlane.xlu0 %365
  %v367 = vsel %vm61, %v333, 0.0
  %368 = vadd.xlane.f32.xlu0 %v367
  %v369 = vpop.xlane.xlu0 %368
  %v370 = vsel %vm61, %v335, 0.0
  %371 = vadd.xlane.f32.xlu0 %v370
  %v372 = vpop.xlane.xlu0 %371
  %v373 = vsel %vm61, %v337, 0.0
  %374 = vadd.xlane.f32.xlu0 %v373
  %v375 = vpop.xlane.xlu0 %374
  %v376 = vsel %vm61, %v339, 0.0
  %377 = vadd.xlane.f32.xlu0 %v376
  %v378 = vpop.xlane.xlu0 %377
  %v379 = vsel %vm61, %v341, 0.0
  %380 = vadd.xlane.f32.xlu0 %v379
  %v381 = vpop.xlane.xlu0 %380
  %v382 = vadd.f32 %v350, %v360
  %v383 = vadd.f32 %v351, %v363
  %v384 = vadd.f32 %v352, %v366
  %v385 = vadd.f32 %v353, %v369
  %v386 = vadd.f32 %v354, %v372
  %v387 = vadd.f32 %v355, %v375
  %v388 = vadd.f32 %v356, %v378
  %v389 = vadd.f32 %v357, %v381
  %vm390 = vcmask 7168
  %391 = vst.msk [vmem:[#allocation3] sm:$0xff] %vm390, %v382
  %392 = vst.msk [vmem:[#allocation3 + $0x8] sm:$0xff] %vm390, %v383
  %393 = vst.msk [vmem:[#allocation3 + $0x10] sm:$0xff] %vm390, %v384
  %394 = vst.msk [vmem:[#allocation3 + $0x18] sm:$0xff] %vm390, %v385
  %395 = vst.msk [vmem:[#allocation3 + $0x20] sm:$0xff] %vm390, %v386
  %396 = vst.msk [vmem:[#allocation3 + $0x28] sm:$0xff] %vm390, %v387
  %397 = vst.msk [vmem:[#allocation3 + $0x30] sm:$0xff] %vm390, %v388
  %398 = vst.msk [vmem:[#allocation3 + $0x38] sm:$0xff] %vm390, %v389
  %v399 = vld [vmem:[#allocation4] sm:$0xff]
  %v400 = vld [vmem:[#allocation4 + $0x8] sm:$0xff]
  %v401 = vld [vmem:[#allocation4 + $0x10] sm:$0xff]
  %v402 = vld [vmem:[#allocation4 + $0x18] sm:$0xff]
  %v403 = vld [vmem:[#allocation4 + $0x20] sm:$0xff]
  %v404 = vld [vmem:[#allocation4 + $0x28] sm:$0xff]
  %v405 = vld [vmem:[#allocation4 + $0x30] sm:$0xff]
  %v406 = vld [vmem:[#allocation4 + $0x38] sm:$0xff]
  %408 = vset.pattern.permute.xlu0 0
  %409 = vperm.xlu0 %408, %v263
  %v410 = vpop.permute.xlu0 %409
  %413 = vset.pattern.permute.xlu0 0
  %414 = vperm.xlu0 %413, %v265
  %v415 = vpop.permute.xlu0 %414
  %418 = vset.pattern.permute.xlu0 0
  %419 = vperm.xlu0 %418, %v267
  %v420 = vpop.permute.xlu0 %419
  %423 = vset.pattern.permute.xlu0 0
  %424 = vperm.xlu0 %423, %v269
  %v425 = vpop.permute.xlu0 %424
  %428 = vset.pattern.permute.xlu0 0
  %429 = vperm.xlu0 %428, %v271
  %v430 = vpop.permute.xlu0 %429
  %433 = vset.pattern.permute.xlu0 0
  %434 = vperm.xlu0 %433, %v273
  %v435 = vpop.permute.xlu0 %434
  %438 = vset.pattern.permute.xlu0 0
  %439 = vperm.xlu0 %438, %v275
  %v440 = vpop.permute.xlu0 %439
  %443 = vset.pattern.permute.xlu0 0
  %444 = vperm.xlu0 %443, %v277
  %v445 = vpop.permute.xlu0 %444
  %v447 = vmul.f32 %v410, %v399
  %v448 = vmul.f32 %v415, %v400
  %v449 = vmul.f32 %v420, %v401
  %v450 = vmul.f32 %v425, %v402
  %v451 = vmul.f32 %v430, %v403
  %v452 = vmul.f32 %v435, %v404
  %v453 = vmul.f32 %v440, %v405
  %v454 = vmul.f32 %v445, %v406
  %v455 = vpack.c.bf16 %v327, %v327
  %v456 = vpack.c.bf16 %v329, %v329
  %v457 = vpack.c.bf16 %v331, %v331
  %v458 = vpack.c.bf16 %v333, %v333
  %v459 = vpack.c.bf16 %v335, %v335
  %v460 = vpack.c.bf16 %v337, %v337
  %v461 = vpack.c.bf16 %v339, %v339
  %v462 = vpack.c.bf16 %v341, %v341
  %v463 = vld [vmem:[%s2] sm:$0xf]
  %v464 = vld [vmem:[%s2 + $0x4] sm:$0xf]
  %v465 = vld [vmem:[%s2 + $0x8] sm:$0xf]
  %v466 = vld [vmem:[%s2 + $0xc] sm:$0xf]
  %v467 = vld [vmem:[%s2 + $0x10] sm:$0xf]
  %v468 = vld [vmem:[%s2 + $0x14] sm:$0xf]
  %v469 = vld [vmem:[%s2 + $0x18] sm:$0xf]
  %v470 = vld [vmem:[%s2 + $0x1c] sm:$0xf]
  %v472 = vsel %vm61, %v455, 0
  %vm474 = vcmask 1043456
  %v476 = vsel %vm474, %v463, 0
  %478 = vmatpush.bf16.msra.mxu0 0
  %479 = vmatpush.bf16.msra.mxu0 0
  %480 = vmatpush.bf16.msra.mxu0 0
  %481 = vmatpush.bf16.msra.mxu0 0
  %482 = vmatpush.bf16.msra.mxu0 0
  %483 = vmatpush.bf16.msra.mxu0 0
  %484 = vmatpush.bf16.msra.mxu0 0
  %485 = vmatpush.bf16.msra.mxu0 %v476
  %486 = vmatmul.bf16.gmra.mxu0 %v472
  %v487 = vpop.f32.mrf.mxu0
  %v488 = vadd.f32 0.0, %v487
  %v489 = vpop.f32.mrf.mxu0
  %490 = vdwg.mxu0
  %v492 = vsel %vm61, %v456, 0
  %v495 = vsel %vm474, %v464, 0
  %497 = vmatpush.bf16.msra.mxu0 0
  %498 = vmatpush.bf16.msra.mxu0 0
  %499 = vmatpush.bf16.msra.mxu0 0
  %500 = vmatpush.bf16.msra.mxu0 0
  %501 = vmatpush.bf16.msra.mxu0 0
  %502 = vmatpush.bf16.msra.mxu0 0
  %503 = vmatpush.bf16.msra.mxu0 0
  %504 = vmatpush.bf16.msra.mxu0 %v495
  %505 = vmatmul.bf16.gmra.mxu0 %v492
  %v506 = vpop.f32.mrf.mxu0
  %v507 = vadd.f32 0.0, %v506
  %v508 = vpop.f32.mrf.mxu0
  %509 = vdwg.mxu0
  %v511 = vsel %vm61, %v457, 0
  %v514 = vsel %vm474, %v465, 0
  %516 = vmatpush.bf16.msra.mxu0 0
  %517 = vmatpush.bf16.msra.mxu0 0
  %518 = vmatpush.bf16.msra.mxu0 0
  %519 = vmatpush.bf16.msra.mxu0 0
  %520 = vmatpush.bf16.msra.mxu0 0
  %521 = vmatpush.bf16.msra.mxu0 0
  %522 = vmatpush.bf16.msra.mxu0 0
  %523 = vmatpush.bf16.msra.mxu0 %v514
  %524 = vmatmul.bf16.gmra.mxu0 %v511
  %v525 = vpop.f32.mrf.mxu0
  %v526 = vadd.f32 0.0, %v525
  %v527 = vpop.f32.mrf.mxu0
  %528 = vdwg.mxu0
  %v530 = vsel %vm61, %v458, 0
  %v533 = vsel %vm474, %v466, 0
  %535 = vmatpush.bf16.msra.mxu0 0
  %536 = vmatpush.bf16.msra.mxu0 0
  %537 = vmatpush.bf16.msra.mxu0 0
  %538 = vmatpush.bf16.msra.mxu0 0
  %539 = vmatpush.bf16.msra.mxu0 0
  %540 = vmatpush.bf16.msra.mxu0 0
  %541 = vmatpush.bf16.msra.mxu0 0
  %542 = vmatpush.bf16.msra.mxu0 %v533
  %543 = vmatmul.bf16.gmra.mxu0 %v530
  %v544 = vpop.f32.mrf.mxu0
  %v545 = vadd.f32 0.0, %v544
  %v546 = vpop.f32.mrf.mxu0
  %547 = vdwg.mxu0
  %v549 = vsel %vm61, %v459, 0
  %v552 = vsel %vm474, %v467, 0
  %554 = vmatpush.bf16.msra.mxu0 0
  %555 = vmatpush.bf16.msra.mxu0 0
  %556 = vmatpush.bf16.msra.mxu0 0
  %557 = vmatpush.bf16.msra.mxu0 0
  %558 = vmatpush.bf16.msra.mxu0 0
  %559 = vmatpush.bf16.msra.mxu0 0
  %560 = vmatpush.bf16.msra.mxu0 0
  %561 = vmatpush.bf16.msra.mxu0 %v552
  %562 = vmatmul.bf16.gmra.mxu0 %v549
  %v563 = vpop.f32.mrf.mxu0
  %v564 = vadd.f32 0.0, %v563
  %v565 = vpop.f32.mrf.mxu0
  %566 = vdwg.mxu0
  %v568 = vsel %vm61, %v460, 0
  %v571 = vsel %vm474, %v468, 0
  %573 = vmatpush.bf16.msra.mxu0 0
  %574 = vmatpush.bf16.msra.mxu0 0
  %575 = vmatpush.bf16.msra.mxu0 0
  %576 = vmatpush.bf16.msra.mxu0 0
  %577 = vmatpush.bf16.msra.mxu0 0
  %578 = vmatpush.bf16.msra.mxu0 0
  %579 = vmatpush.bf16.msra.mxu0 0
  %580 = vmatpush.bf16.msra.mxu0 %v571
  %581 = vmatmul.bf16.gmra.mxu0 %v568
  %v582 = vpop.f32.mrf.mxu0
  %v583 = vadd.f32 0.0, %v582
  %v584 = vpop.f32.mrf.mxu0
  %585 = vdwg.mxu0
  %v587 = vsel %vm61, %v461, 0
  %v590 = vsel %vm474, %v469, 0
  %592 = vmatpush.bf16.msra.mxu0 0
  %593 = vmatpush.bf16.msra.mxu0 0
  %594 = vmatpush.bf16.msra.mxu0 0
  %595 = vmatpush.bf16.msra.mxu0 0
  %596 = vmatpush.bf16.msra.mxu0 0
  %597 = vmatpush.bf16.msra.mxu0 0
  %598 = vmatpush.bf16.msra.mxu0 0
  %599 = vmatpush.bf16.msra.mxu0 %v590
  %600 = vmatmul.bf16.gmra.mxu0 %v587
  %v601 = vpop.f32.mrf.mxu0
  %v602 = vadd.f32 0.0, %v601
  %v603 = vpop.f32.mrf.mxu0
  %604 = vdwg.mxu0
  %v606 = vsel %vm61, %v462, 0
  %v609 = vsel %vm474, %v470, 0
  %611 = vmatpush.bf16.msra.mxu0 0
  %612 = vmatpush.bf16.msra.mxu0 0
  %613 = vmatpush.bf16.msra.mxu0 0
  %614 = vmatpush.bf16.msra.mxu0 0
  %615 = vmatpush.bf16.msra.mxu0 0
  %616 = vmatpush.bf16.msra.mxu0 0
  %617 = vmatpush.bf16.msra.mxu0 0
  %618 = vmatpush.bf16.msra.mxu0 %v609
  %619 = vmatmul.bf16.gmra.mxu0 %v606
  %v620 = vpop.f32.mrf.mxu0
  %v621 = vadd.f32 0.0, %v620
  %v622 = vpop.f32.mrf.mxu0
  %623 = vdwg.mxu0
  %v624 = vadd.f32 %v447, %v488
  %v625 = vadd.f32 %v448, %v507
  %v626 = vadd.f32 %v449, %v526
  %v627 = vadd.f32 %v450, %v545
  %v628 = vadd.f32 %v451, %v564
  %v629 = vadd.f32 %v452, %v583
  %v630 = vadd.f32 %v453, %v602
  %v631 = vadd.f32 %v454, %v621
  %632 = vst.msk [vmem:[#allocation4] sm:$0xff] %vm61, %v624
  %633 = vst.msk [vmem:[#allocation4 + $0x8] sm:$0xff] %vm61, %v625
  %634 = vst.msk [vmem:[#allocation4 + $0x10] sm:$0xff] %vm61, %v626
  %635 = vst.msk [vmem:[#allocation4 + $0x18] sm:$0xff] %vm61, %v627
  %636 = vst.msk [vmem:[#allocation4 + $0x20] sm:$0xff] %vm61, %v628
  %637 = vst.msk [vmem:[#allocation4 + $0x28] sm:$0xff] %vm61, %v629
  %638 = vst.msk [vmem:[#allocation4 + $0x30] sm:$0xff] %vm61, %v630
  %639 = vst.msk [vmem:[#allocation4 + $0x38] sm:$0xff] %vm61, %v631
  %640 = vst.msk [vmem:[#allocation2] sm:$0xff] %vm390, %v246
  %641 = vst.msk [vmem:[#allocation2 + $0x8] sm:$0xff] %vm390, %v247
  %642 = vst.msk [vmem:[#allocation2 + $0x10] sm:$0xff] %vm390, %v248
  %643 = vst.msk [vmem:[#allocation2 + $0x18] sm:$0xff] %vm390, %v249
  %644 = vst.msk [vmem:[#allocation2 + $0x20] sm:$0xff] %vm390, %v250
  %645 = vst.msk [vmem:[#allocation2 + $0x28] sm:$0xff] %vm390, %v251
  %646 = vst.msk [vmem:[#allocation2 + $0x30] sm:$0xff] %vm390, %v252
  %647 = vst.msk [vmem:[#allocation2 + $0x38] sm:$0xff] %vm390, %v253
  // Predicated region
  $region18: #{transformer_layer_forward.5} parent=0 // pred_check
    %p648 = pneg %p15
  $region19: #{transformer_layer_forward.5} parent=0 // pred_check_branch
    %650 = sbr.rel (%p648) target = $region21
  $region20: #{transformer_layer_forward.5} parent=0 // pred_region
    %v651 = vld [vmem:[#allocation4] sm:$0xff]
    %v652 = vld [vmem:[#allocation4 + $0x8] sm:$0xff]
    %v653 = vld [vmem:[#allocation4 + $0x10] sm:$0xff]
    %v654 = vld [vmem:[#allocation4 + $0x18] sm:$0xff]
    %v655 = vld [vmem:[#allocation4 + $0x20] sm:$0xff]
    %v656 = vld [vmem:[#allocation4 + $0x28] sm:$0xff]
    %v657 = vld [vmem:[#allocation4 + $0x30] sm:$0xff]
    %v658 = vld [vmem:[#allocation4 + $0x38] sm:$0xff]
    %v659 = vld [vmem:[#allocation3] sm:$0xff]
    %v660 = vld [vmem:[#allocation3 + $0x8] sm:$0xff]
    %v661 = vld [vmem:[#allocation3 + $0x10] sm:$0xff]
    %v662 = vld [vmem:[#allocation3 + $0x18] sm:$0xff]
    %v663 = vld [vmem:[#allocation3 + $0x20] sm:$0xff]
    %v664 = vld [vmem:[#allocation3 + $0x28] sm:$0xff]
    %v665 = vld [vmem:[#allocation3 + $0x30] sm:$0xff]
    %v666 = vld [vmem:[#allocation3 + $0x38] sm:$0xff]
    %v667 = vrcp.pop %v659
    %v668 = vrcp.pop %v660
    %v669 = vrcp.pop %v661
    %v670 = vrcp.pop %v662
    %v671 = vrcp.pop %v663
    %v672 = vrcp.pop %v664
    %v673 = vrcp.pop %v665
    %v674 = vrcp.pop %v666
    %676 = vset.pattern.permute.xlu0 0
    %677 = vperm.xlu0 %676, %v667
    %v678 = vpop.permute.xlu0 %677
    %681 = vset.pattern.permute.xlu0 0
    %682 = vperm.xlu0 %681, %v668
    %v683 = vpop.permute.xlu0 %682
    %686 = vset.pattern.permute.xlu0 0
    %687 = vperm.xlu0 %686, %v669
    %v688 = vpop.permute.xlu0 %687
    %691 = vset.pattern.permute.xlu0 0
    %692 = vperm.xlu0 %691, %v670
    %v693 = vpop.permute.xlu0 %692
    %696 = vset.pattern.permute.xlu0 0
    %697 = vperm.xlu0 %696, %v671
    %v698 = vpop.permute.xlu0 %697
    %701 = vset.pattern.permute.xlu0 0
    %702 = vperm.xlu0 %701, %v672
    %v703 = vpop.permute.xlu0 %702
    %706 = vset.pattern.permute.xlu0 0
    %707 = vperm.xlu0 %706, %v673
    %v708 = vpop.permute.xlu0 %707
    %711 = vset.pattern.permute.xlu0 0
    %712 = vperm.xlu0 %711, %v674
    %v713 = vpop.permute.xlu0 %712
    %v715 = vmul.f32 %v651, %v678
    %v716 = vmul.f32 %v652, %v683
    %v717 = vmul.f32 %v653, %v688
    %v718 = vmul.f32 %v654, %v693
    %v719 = vmul.f32 %v655, %v698
    %v720 = vmul.f32 %v656, %v703
    %v721 = vmul.f32 %v657, %v708
    %v722 = vmul.f32 %v658, %v713
    %v723 = vpack.c.bf16 %v715, %v715
    %v724 = vpack.c.bf16 %v716, %v716
    %v725 = vpack.c.bf16 %v717, %v717
    %v726 = vpack.c.bf16 %v718, %v718
    %v727 = vpack.c.bf16 %v719, %v719
    %v728 = vpack.c.bf16 %v720, %v720
    %v729 = vpack.c.bf16 %v721, %v721
    %v730 = vpack.c.bf16 %v722, %v722
    %vm731 = vcmask 60416
    %732 = vst.msk [vmem:[%s3] sm:$0xf] %vm731, %v723
    %733 = vst.msk [vmem:[%s3 + $0x4] sm:$0xf] %vm731, %v724
    %734 = vst.msk [vmem:[%s3 + $0x8] sm:$0xf] %vm731, %v725
    %735 = vst.msk [vmem:[%s3 + $0xc] sm:$0xf] %vm731, %v726
    %736 = vst.msk [vmem:[%s3 + $0x10] sm:$0xf] %vm731, %v727
    %737 = vst.msk [vmem:[%s3 + $0x14] sm:$0xf] %vm731, %v728
    %738 = vst.msk [vmem:[%s3 + $0x18] sm:$0xf] %vm731, %v729
    %739 = vst.msk [vmem:[%s3 + $0x1c] sm:$0xf] %vm731, %v730
  $region21: #{transformer_layer_forward.5} parent=0 // pred_fallthru
    _
  // Predicated region
  $region22: #{transformer_layer_forward.5} parent=0 // pred_check
    _
  $region23: #{transformer_layer_forward.5} parent=0 // pred_check_branch
    %741 = sbr.rel (0) target = $region25
  $region24: #{transformer_layer_forward.5} parent=0 // pred_region
    _
  $region25: #{transformer_layer_forward.5} parent=0 // pred_fallthru
    _
  // Predicated region
  $region26: #{transformer_layer_forward.5} parent=0 // pred_check
    _
  $region27: #{transformer_layer_forward.5} parent=0 // pred_check_branch
    %743 = sbr.rel (0) target = $region29
  $region28: #{transformer_layer_forward.5} parent=0 // pred_region
    _
  $region29: #{transformer_layer_forward.5} parent=0 // pred_fallthru
    _

</llo_original>
